<compile_context>
chip_gen: v5e
topology: v5e:2x2
jax: 0.10.0
libtpu: 0.0.40
codegen_flags: <defaults>
</compile_context>

<pallas_src>
import functools

import jax
import jax.numpy as jnp
from jax import lax
from jax.experimental import pallas as pl
from jax.experimental.pallas import tpu as pltpu


def _round_up(x, m):
    return (x + m - 1) // m * m


def _torch_w_to_mat(w_oihw):
    """(Cout, Cin, 3, 3) torch layout -> (Cout, 9*Cin), tap-major (ky,kx), then Cin."""
    co, ci = w_oihw.shape[0], w_oihw.shape[1]
    # [co, ci, ky, kx] -> [co, ky, kx, ci] -> [co, (ky*3+kx)*ci + ci_idx]
    return jnp.transpose(w_oihw, (0, 2, 3, 1)).reshape(co, 9 * ci)


def _make_fused_kernel(H, W, PP):
    W2 = W + 2
    # Centered tap offsets, tap-major (ky, kx) ordering, taken mod PP so each
    # shifted frame is a static slice of the doubled buffer [p, p].
    offs = [((ky - 1) * W2 + (kx - 1)) % PP
            for ky in range(3) for kx in range(3)]

    def kernel(xd_ref, xc_ref, w1_ref, w2_ref, w3_ref,
               b1_ref, b2_ref, b3_ref, mask_ref, o_ref):
        mask = mask_ref[...]                                   # (1, PP) f32

        def layer(p, w_ref, b_ref):
            # p: (Cin, PP) bf16 padded frame -> (Cout, PP) f32 padded frame
            pd = jnp.concatenate([p, p], axis=1)               # (Cin, 2*PP)
            im2col = jnp.concatenate(
                [pd[:, o:o + PP] for o in offs], axis=0)       # (9*Cin, PP)
            acc = jnp.dot(w_ref[...], im2col,
                          preferred_element_type=jnp.float32)  # (Cout, PP)
            acc = jnp.maximum(acc + b_ref[...], 0.0)           # bias + ReLU
            return acc * mask                                  # re-zero pad cols

        # channel concat of the two inputs (sublane-aligned, cheap)
        p1 = jnp.concatenate([xd_ref[0], xc_ref[0]], axis=0)   # (8*gf, PP) bf16
        a1 = layer(p1, w1_ref, b1_ref).astype(jnp.bfloat16)    # (4*gf, PP)
        a2 = layer(a1, w2_ref, b2_ref).astype(jnp.bfloat16)    # (2*gf, PP)
        o_ref[0] = layer(a2, w3_ref, b3_ref)                   # (4*gf, PP) f32

    return kernel


def comb_layers_fused(xd_p, xc_p, w1m, w2m, w3m, b1, b2, b3, mask, H, W):
    """Fused 3x(conv3x3 pad=1 + ReLU).

    xd_p, xc_p: (N, C4, PP) bf16 padded flattened frames (layer-1 inputs)
    w*m:        (Cout, 9*Cin) bf16 matmul-ready weights
    b*:         (Cout, 1) f32 biases
    mask:       (1, PP) f32 interior mask
    returns:    (N, Cout3, PP) f32 padded flattened frame of the final layer
    """
    N, C4, PP = xd_p.shape
    M3 = w3m.shape[0]

    kernel = _make_fused_kernel(H, W, PP)
    return pl.pallas_call(
        kernel,
        out_shape=jax.ShapeDtypeStruct((N, M3, PP), jnp.float32),
        grid_spec=pltpu.PrefetchScalarGridSpec(
            num_scalar_prefetch=0,
            grid=(N,),
            in_specs=[
                pl.BlockSpec((1, C4, PP), lambda n: (n, 0, 0)),   # h_dyn frame
                pl.BlockSpec((1, C4, PP), lambda n: (n, 0, 0)),   # h_cont frame
                pl.BlockSpec(w1m.shape, lambda n: (0, 0)),
                pl.BlockSpec(w2m.shape, lambda n: (0, 0)),
                pl.BlockSpec(w3m.shape, lambda n: (0, 0)),
                pl.BlockSpec(b1.shape, lambda n: (0, 0)),
                pl.BlockSpec(b2.shape, lambda n: (0, 0)),
                pl.BlockSpec(b3.shape, lambda n: (0, 0)),
                pl.BlockSpec(mask.shape, lambda n: (0, 0)),
            ],
            out_specs=pl.BlockSpec((1, M3, PP), lambda n: (n, 0, 0)),
        ),
        compiler_params=pltpu.CompilerParams(
            dimension_semantics=("parallel",)),
    )(xd_p, xc_p, w1m, w2m, w3m, b1, b2, b3, mask)


class CombLayersPallas:
    """JAX/Pallas equivalent of CombLayers.forward (inference)."""

    def __init__(self, gf_dim, key):
        c_in1, c_out1 = gf_dim * 8, gf_dim * 4
        c_out2, c_out3 = gf_dim * 2, gf_dim * 4
        keys = jax.random.split(key, 6)

        def conv_init(kw, kb, cin, cout):
            # deterministic init matching torch Conv2d default scale (U[-k, k])
            k = 1.0 / jnp.sqrt(cin * 3.0 * 3.0)
            w = jax.random.uniform(kw, (cout, cin, 3, 3), jnp.float32, -k, k)
            b = jax.random.uniform(kb, (cout,), jnp.float32, -k, k)
            return w, b

        self.w1, self.b1 = conv_init(keys[0], keys[1], c_in1, c_out1)
        self.w2, self.b2 = conv_init(keys[2], keys[3], c_out1, c_out2)
        self.w3, self.b3 = conv_init(keys[4], keys[5], c_out2, c_out3)

        # matmul-ready bf16 weights (cast ONCE at init), column-vector f32 biases
        self.w1_m = _torch_w_to_mat(self.w1).astype(jnp.bfloat16)
        self.w2_m = _torch_w_to_mat(self.w2).astype(jnp.bfloat16)
        self.w3_m = _torch_w_to_mat(self.w3).astype(jnp.bfloat16)
        self.b1_c = self.b1.reshape(-1, 1)
        self.b2_c = self.b2.reshape(-1, 1)
        self.b3_c = self.b3.reshape(-1, 1)

    @functools.partial(jax.jit, static_argnums=0)
    def __call__(self, h_dyn_nchw, h_cont_nchw):
        N, C4, H, W = h_dyn_nchw.shape
        W2 = W + 2
        p_img = (H + 2) * W2
        PP = _round_up(p_img, 128)

        def prep(x):  # NCHW -> padded flattened frame, bf16 (layer-1 only)
            xp = jnp.pad(x, ((0, 0), (0, 0), (1, 1), (1, 1)))   # (N,C,H+2,W+2)
            xp = xp.reshape(N, C4, p_img)
            xp = jnp.pad(xp, ((0, 0), (0, 0), (0, PP - p_img)))
            return xp.astype(jnp.bfloat16)

        # interior mask of the padded frame (1 on real pixels, 0 on padding)
        q = jnp.arange(PP)
        r, s = q // W2, q % W2
        mask = ((r >= 1) & (r <= H) & (s >= 1) & (s <= W))
        mask = mask.astype(jnp.float32).reshape(1, PP)

        out_flat = comb_layers_fused(prep(h_dyn_nchw), prep(h_cont_nchw),
                                     self.w1_m, self.w2_m, self.w3_m,
                                     self.b1_c, self.b2_c, self.b3_c,
                                     mask, H, W)
        # peel the interior: column (i+1)*(W+2) + (j+1) holds output pixel (i, j)
        out = out_flat[:, :, :p_img].reshape(N, -1, H + 2, W2)
        return out[:, :, 1:H + 1, 1:W + 1]                      # NCHW

def _reference_forward(model, h_dyn, h_cont):
    """Pure-JAX (lax.conv, f32) reference for correctness checking."""
    x = jnp.concatenate([h_dyn, h_cont], axis=1)
    dn = lax.conv_dimension_numbers(x.shape, model.w1.shape,
                                    ("NCHW", "OIHW", "NCHW"))
    for w, b in ((model.w1, model.b1), (model.w2, model.b2),
                 (model.w3, model.b3)):
        x = lax.conv_general_dilated(x, w, (1, 1), ((1, 1), (1, 1)),
                                     dimension_numbers=dn)
        x = x + b.reshape(1, -1, 1, 1)
        x = jnp.maximum(x, 0.0)
    return x


if __name__ == "__main__":
    gf_dim = 8
    N, H, W = 2, 16, 16
    key = jax.random.PRNGKey(0)
    k_param, k_dyn, k_cont = jax.random.split(key, 3)

    model = CombLayersPallas(gf_dim, k_param)

    h_dyn = jax.random.normal(k_dyn, (N, gf_dim * 4, H, W), jnp.float32)
    h_cont = jax.random.normal(k_cont, (N, gf_dim * 4, H, W), jnp.float32)

    out = jax.block_until_ready(model(h_dyn, h_cont))
    ref = jax.block_until_ready(_reference_forward(model, h_dyn, h_cont))

    assert out.shape == (N, gf_dim * 4, H, W), out.shape
    # bf16 MXU inputs with f32 accumulation -> tolerance loosened vs f32 ref
    max_err = float(jnp.max(jnp.abs(out - ref)))
    assert jnp.allclose(out, ref, atol=5e-2, rtol=5e-2), max_err

    print("KERNEL_OK")
</pallas_src>

<mosaic_0001>
module attributes {stable_mosaic.version = 11 : i64} {
  func.func @kernel(%arg0: i32, %arg1: memref<1x32x384xbf16, #tpu.memory_space<vmem>>, %arg2: memref<1x32x384xbf16, #tpu.memory_space<vmem>>, %arg3: memref<32x576xbf16, #tpu.memory_space<vmem>>, %arg4: memref<16x288xbf16, #tpu.memory_space<vmem>>, %arg5: memref<32x144xbf16, #tpu.memory_space<vmem>>, %arg6: memref<32x1xf32, #tpu.memory_space<vmem>>, %arg7: memref<16x1xf32, #tpu.memory_space<vmem>>, %arg8: memref<32x1xf32, #tpu.memory_space<vmem>>, %arg9: memref<1x384xf32, #tpu.memory_space<vmem>>, %arg10: memref<1x32x384xf32, #tpu.memory_space<vmem>>) attributes {dimension_semantics = [#tpu.dimension_semantics<parallel>], iteration_bounds = array<i64: 2>, scalar_prefetch = 0 : i64, scratch_operands = 0 : i64, tpu.core_type = #tpu.core_type<tc>, window_params = [{transform_indices = @transform_0, window_bounds = array<i64: 1, 32, 384>}, {transform_indices = @transform_1, window_bounds = array<i64: 1, 32, 384>}, {pipeline_mode = #tpu.pipeline_mode<synchronous>, transform_indices = @transform_2, window_bounds = array<i64: 32, 576>}, {pipeline_mode = #tpu.pipeline_mode<synchronous>, transform_indices = @transform_3, window_bounds = array<i64: 16, 288>}, {pipeline_mode = #tpu.pipeline_mode<synchronous>, transform_indices = @transform_4, window_bounds = array<i64: 32, 144>}, {pipeline_mode = #tpu.pipeline_mode<synchronous>, transform_indices = @transform_5, window_bounds = array<i64: 32, 1>}, {pipeline_mode = #tpu.pipeline_mode<synchronous>, transform_indices = @transform_6, window_bounds = array<i64: 16, 1>}, {pipeline_mode = #tpu.pipeline_mode<synchronous>, transform_indices = @transform_7, window_bounds = array<i64: 32, 1>}, {pipeline_mode = #tpu.pipeline_mode<synchronous>, transform_indices = @transform_8, window_bounds = array<i64: 1, 384>}, {transform_indices = @transform_9, window_bounds = array<i64: 1, 32, 384>}]} {
    %c0 = arith.constant 0 : index
    %c0_0 = arith.constant 0 : index
    %0 = vector.load %arg9[%c0, %c0_0] : memref<1x384xf32, #tpu.memory_space<vmem>>, vector<1x384xf32>
    %c0_1 = arith.constant 0 : index
    %c0_2 = arith.constant 0 : index
    %c0_3 = arith.constant 0 : index
    %1 = vector.load %arg1[%c0_1, %c0_2, %c0_3] : memref<1x32x384xbf16, #tpu.memory_space<vmem>>, vector<1x32x384xbf16>
    %2 = vector.shape_cast %1 : vector<1x32x384xbf16> to vector<32x384xbf16>
    %c0_4 = arith.constant 0 : index
    %c0_5 = arith.constant 0 : index
    %c0_6 = arith.constant 0 : index
    %3 = vector.load %arg2[%c0_4, %c0_5, %c0_6] : memref<1x32x384xbf16, #tpu.memory_space<vmem>>, vector<1x32x384xbf16>
    %4 = vector.shape_cast %3 : vector<1x32x384xbf16> to vector<32x384xbf16>
    %5 = tpu.concatenate %2, %4 in 0 : vector<32x384xbf16>, vector<32x384xbf16> -> vector<64x384xbf16>
    %6 = tpu.concatenate %5, %5 in 1 : vector<64x384xbf16>, vector<64x384xbf16> -> vector<64x768xbf16>
    %7 = vector.extract_strided_slice %6 {offsets = [0, 365], sizes = [64, 384], strides = [1, 1]} : vector<64x768xbf16> to vector<64x384xbf16>
    %8 = vector.extract_strided_slice %6 {offsets = [0, 366], sizes = [64, 384], strides = [1, 1]} : vector<64x768xbf16> to vector<64x384xbf16>
    %9 = vector.extract_strided_slice %6 {offsets = [0, 367], sizes = [64, 384], strides = [1, 1]} : vector<64x768xbf16> to vector<64x384xbf16>
    %10 = vector.extract_strided_slice %6 {offsets = [0, 383], sizes = [64, 384], strides = [1, 1]} : vector<64x768xbf16> to vector<64x384xbf16>
    %11 = vector.extract_strided_slice %6 {offsets = [0, 0], sizes = [64, 384], strides = [1, 1]} : vector<64x768xbf16> to vector<64x384xbf16>
    %12 = vector.extract_strided_slice %6 {offsets = [0, 1], sizes = [64, 384], strides = [1, 1]} : vector<64x768xbf16> to vector<64x384xbf16>
    %13 = vector.extract_strided_slice %6 {offsets = [0, 17], sizes = [64, 384], strides = [1, 1]} : vector<64x768xbf16> to vector<64x384xbf16>
    %14 = vector.extract_strided_slice %6 {offsets = [0, 18], sizes = [64, 384], strides = [1, 1]} : vector<64x768xbf16> to vector<64x384xbf16>
    %15 = vector.extract_strided_slice %6 {offsets = [0, 19], sizes = [64, 384], strides = [1, 1]} : vector<64x768xbf16> to vector<64x384xbf16>
    %16 = tpu.concatenate %7, %8, %9, %10, %11, %12, %13, %14, %15 in 0 : vector<64x384xbf16>, vector<64x384xbf16>, vector<64x384xbf16>, vector<64x384xbf16>, vector<64x384xbf16>, vector<64x384xbf16>, vector<64x384xbf16>, vector<64x384xbf16>, vector<64x384xbf16> -> vector<576x384xbf16>
    %c0_7 = arith.constant 0 : index
    %c0_8 = arith.constant 0 : index
    %17 = vector.load %arg3[%c0_7, %c0_8] : memref<32x576xbf16, #tpu.memory_space<vmem>>, vector<32x576xbf16>
    %cst = arith.constant dense<0.000000e+00> : vector<32x384xf32>
    %18 = tpu.matmul %17, %16, %cst {dimension_numbers = #tpu.dot_dimension_numbers<[1], [0], [0], [1], [0, 0, 1, 1], [], []>} : vector<32x576xbf16>, vector<576x384xbf16>, vector<32x384xf32> -> vector<32x384xf32>
    %c0_9 = arith.constant 0 : index
    %c0_10 = arith.constant 0 : index
    %19 = vector.load %arg6[%c0_9, %c0_10] : memref<32x1xf32, #tpu.memory_space<vmem>>, vector<32x1xf32>
    %20 = vector.broadcast %19 : vector<32x1xf32> to vector<32x384xf32>
    %21 = arith.addf %18, %20 : vector<32x384xf32>
    %cst_11 = arith.constant 0.000000e+00 : f32
    %22 = vector.broadcast %cst_11 : f32 to vector<32x384xf32>
    %23 = arith.maximumf %21, %22 : vector<32x384xf32>
    %24 = vector.broadcast %0 : vector<1x384xf32> to vector<32x384xf32>
    %25 = arith.mulf %23, %24 : vector<32x384xf32>
    %26 = arith.truncf %25 : vector<32x384xf32> to vector<32x384xbf16>
    %27 = tpu.concatenate %26, %26 in 1 : vector<32x384xbf16>, vector<32x384xbf16> -> vector<32x768xbf16>
    %28 = vector.extract_strided_slice %27 {offsets = [0, 365], sizes = [32, 384], strides = [1, 1]} : vector<32x768xbf16> to vector<32x384xbf16>
    %29 = vector.extract_strided_slice %27 {offsets = [0, 366], sizes = [32, 384], strides = [1, 1]} : vector<32x768xbf16> to vector<32x384xbf16>
    %30 = vector.extract_strided_slice %27 {offsets = [0, 367], sizes = [32, 384], strides = [1, 1]} : vector<32x768xbf16> to vector<32x384xbf16>
    %31 = vector.extract_strided_slice %27 {offsets = [0, 383], sizes = [32, 384], strides = [1, 1]} : vector<32x768xbf16> to vector<32x384xbf16>
    %32 = vector.extract_strided_slice %27 {offsets = [0, 0], sizes = [32, 384], strides = [1, 1]} : vector<32x768xbf16> to vector<32x384xbf16>
    %33 = vector.extract_strided_slice %27 {offsets = [0, 1], sizes = [32, 384], strides = [1, 1]} : vector<32x768xbf16> to vector<32x384xbf16>
    %34 = vector.extract_strided_slice %27 {offsets = [0, 17], sizes = [32, 384], strides = [1, 1]} : vector<32x768xbf16> to vector<32x384xbf16>
    %35 = vector.extract_strided_slice %27 {offsets = [0, 18], sizes = [32, 384], strides = [1, 1]} : vector<32x768xbf16> to vector<32x384xbf16>
    %36 = vector.extract_strided_slice %27 {offsets = [0, 19], sizes = [32, 384], strides = [1, 1]} : vector<32x768xbf16> to vector<32x384xbf16>
    %37 = tpu.concatenate %28, %29, %30, %31, %32, %33, %34, %35, %36 in 0 : vector<32x384xbf16>, vector<32x384xbf16>, vector<32x384xbf16>, vector<32x384xbf16>, vector<32x384xbf16>, vector<32x384xbf16>, vector<32x384xbf16>, vector<32x384xbf16>, vector<32x384xbf16> -> vector<288x384xbf16>
    %c0_12 = arith.constant 0 : index
    %c0_13 = arith.constant 0 : index
    %38 = vector.load %arg4[%c0_12, %c0_13] : memref<16x288xbf16, #tpu.memory_space<vmem>>, vector<16x288xbf16>
    %cst_14 = arith.constant dense<0.000000e+00> : vector<16x384xf32>
    %39 = tpu.matmul %38, %37, %cst_14 {dimension_numbers = #tpu.dot_dimension_numbers<[1], [0], [0], [1], [0, 0, 1, 1], [], []>} : vector<16x288xbf16>, vector<288x384xbf16>, vector<16x384xf32> -> vector<16x384xf32>
    %c0_15 = arith.constant 0 : index
    %c0_16 = arith.constant 0 : index
    %40 = vector.load %arg7[%c0_15, %c0_16] : memref<16x1xf32, #tpu.memory_space<vmem>>, vector<16x1xf32>
    %41 = vector.broadcast %40 : vector<16x1xf32> to vector<16x384xf32>
    %42 = arith.addf %39, %41 : vector<16x384xf32>
    %cst_17 = arith.constant 0.000000e+00 : f32
    %43 = vector.broadcast %cst_17 : f32 to vector<16x384xf32>
    %44 = arith.maximumf %42, %43 : vector<16x384xf32>
    %45 = vector.broadcast %0 : vector<1x384xf32> to vector<16x384xf32>
    %46 = arith.mulf %44, %45 : vector<16x384xf32>
    %47 = arith.truncf %46 : vector<16x384xf32> to vector<16x384xbf16>
    %48 = tpu.concatenate %47, %47 in 1 : vector<16x384xbf16>, vector<16x384xbf16> -> vector<16x768xbf16>
    %49 = vector.extract_strided_slice %48 {offsets = [0, 365], sizes = [16, 384], strides = [1, 1]} : vector<16x768xbf16> to vector<16x384xbf16>
    %50 = vector.extract_strided_slice %48 {offsets = [0, 366], sizes = [16, 384], strides = [1, 1]} : vector<16x768xbf16> to vector<16x384xbf16>
    %51 = vector.extract_strided_slice %48 {offsets = [0, 367], sizes = [16, 384], strides = [1, 1]} : vector<16x768xbf16> to vector<16x384xbf16>
    %52 = vector.extract_strided_slice %48 {offsets = [0, 383], sizes = [16, 384], strides = [1, 1]} : vector<16x768xbf16> to vector<16x384xbf16>
    %53 = vector.extract_strided_slice %48 {offsets = [0, 0], sizes = [16, 384], strides = [1, 1]} : vector<16x768xbf16> to vector<16x384xbf16>
    %54 = vector.extract_strided_slice %48 {offsets = [0, 1], sizes = [16, 384], strides = [1, 1]} : vector<16x768xbf16> to vector<16x384xbf16>
    %55 = vector.extract_strided_slice %48 {offsets = [0, 17], sizes = [16, 384], strides = [1, 1]} : vector<16x768xbf16> to vector<16x384xbf16>
    %56 = vector.extract_strided_slice %48 {offsets = [0, 18], sizes = [16, 384], strides = [1, 1]} : vector<16x768xbf16> to vector<16x384xbf16>
    %57 = vector.extract_strided_slice %48 {offsets = [0, 19], sizes = [16, 384], strides = [1, 1]} : vector<16x768xbf16> to vector<16x384xbf16>
    %58 = tpu.concatenate %49, %50, %51, %52, %53, %54, %55, %56, %57 in 0 : vector<16x384xbf16>, vector<16x384xbf16>, vector<16x384xbf16>, vector<16x384xbf16>, vector<16x384xbf16>, vector<16x384xbf16>, vector<16x384xbf16>, vector<16x384xbf16>, vector<16x384xbf16> -> vector<144x384xbf16>
    %c0_18 = arith.constant 0 : index
    %c0_19 = arith.constant 0 : index
    %59 = vector.load %arg5[%c0_18, %c0_19] : memref<32x144xbf16, #tpu.memory_space<vmem>>, vector<32x144xbf16>
    %cst_20 = arith.constant dense<0.000000e+00> : vector<32x384xf32>
    %60 = tpu.matmul %59, %58, %cst_20 {dimension_numbers = #tpu.dot_dimension_numbers<[1], [0], [0], [1], [0, 0, 1, 1], [], []>} : vector<32x144xbf16>, vector<144x384xbf16>, vector<32x384xf32> -> vector<32x384xf32>
    %c0_21 = arith.constant 0 : index
    %c0_22 = arith.constant 0 : index
    %61 = vector.load %arg8[%c0_21, %c0_22] : memref<32x1xf32, #tpu.memory_space<vmem>>, vector<32x1xf32>
    %62 = vector.broadcast %61 : vector<32x1xf32> to vector<32x384xf32>
    %63 = arith.addf %60, %62 : vector<32x384xf32>
    %cst_23 = arith.constant 0.000000e+00 : f32
    %64 = vector.broadcast %cst_23 : f32 to vector<32x384xf32>
    %65 = arith.maximumf %63, %64 : vector<32x384xf32>
    %66 = vector.broadcast %0 : vector<1x384xf32> to vector<32x384xf32>
    %67 = arith.mulf %65, %66 : vector<32x384xf32>
    %c0_24 = arith.constant 0 : index
    %c0_25 = arith.constant 0 : index
    %c0_26 = arith.constant 0 : index
    %68 = vector.load %arg10[%c0_24, %c0_25, %c0_26] : memref<1x32x384xf32, #tpu.memory_space<vmem>>, vector<1x32x384xf32>
    %69 = vector.shape_cast %68 : vector<1x32x384xf32> to vector<32x384xf32>
    %70 = vector.shape_cast %67 : vector<32x384xf32> to vector<1x32x384xf32>
    tpu.vector_store %arg10[%c0_24, %c0_25, %c0_26], %70 {strides = array<i32>} : memref<1x32x384xf32, #tpu.memory_space<vmem>>, vector<1x32x384xf32>,
    return
  }
  func.func @transform_0(%arg0: i32) -> (i32, i32, i32) {
    %c0_i32 = arith.constant 0 : i32
    %c0_i32_0 = arith.constant 0 : i32
    %c0_i32_1 = arith.constant 0 : i32
    return %arg0, %c0_i32, %c0_i32_0 : i32, i32, i32
  }
  func.func @transform_1(%arg0: i32) -> (i32, i32, i32) {
    %c0_i32 = arith.constant 0 : i32
    %c0_i32_0 = arith.constant 0 : i32
    %c0_i32_1 = arith.constant 0 : i32
    return %arg0, %c0_i32, %c0_i32_0 : i32, i32, i32
  }
  func.func @transform_2(%arg0: i32) -> (i32, i32) {
    %c0_i32 = arith.constant 0 : i32
    %c0_i32_0 = arith.constant 0 : i32
    %c0_i32_1 = arith.constant 0 : i32
    return %c0_i32, %c0_i32_0 : i32, i32
  }
  func.func @transform_3(%arg0: i32) -> (i32, i32) {
    %c0_i32 = arith.constant 0 : i32
    %c0_i32_0 = arith.constant 0 : i32
    %c0_i32_1 = arith.constant 0 : i32
    return %c0_i32, %c0_i32_0 : i32, i32
  }
  func.func @transform_4(%arg0: i32) -> (i32, i32) {
    %c0_i32 = arith.constant 0 : i32
    %c0_i32_0 = arith.constant 0 : i32
    %c0_i32_1 = arith.constant 0 : i32
    return %c0_i32, %c0_i32_0 : i32, i32
  }
  func.func @transform_5(%arg0: i32) -> (i32, i32) {
    %c0_i32 = arith.constant 0 : i32
    %c0_i32_0 = arith.constant 0 : i32
    %c0_i32_1 = arith.constant 0 : i32
    return %c0_i32, %c0_i32_0 : i32, i32
  }
  func.func @transform_6(%arg0: i32) -> (i32, i32) {
    %c0_i32 = arith.constant 0 : i32
    %c0_i32_0 = arith.constant 0 : i32
    %c0_i32_1 = arith.constant 0 : i32
    return %c0_i32, %c0_i32_0 : i32, i32
  }
  func.func @transform_7(%arg0: i32) -> (i32, i32) {
    %c0_i32 = arith.constant 0 : i32
    %c0_i32_0 = arith.constant 0 : i32
    %c0_i32_1 = arith.constant 0 : i32
    return %c0_i32, %c0_i32_0 : i32, i32
  }
  func.func @transform_8(%arg0: i32) -> (i32, i32) {
    %c0_i32 = arith.constant 0 : i32
    %c0_i32_0 = arith.constant 0 : i32
    %c0_i32_1 = arith.constant 0 : i32
    return %c0_i32, %c0_i32_0 : i32, i32
  }
  func.func @transform_9(%arg0: i32) -> (i32, i32, i32) {
    %c0_i32 = arith.constant 0 : i32
    %c0_i32_0 = arith.constant 0 : i32
    %c0_i32_1 = arith.constant 0 : i32
    return %arg0, %c0_i32, %c0_i32_0 : i32, i32, i32
  }
}

</mosaic_0001>

<llo_original>
// kernel: a_call__.1
$region0: #{a_call__.1}
  #allocation0 [shape = 'u32[]', space=smem, size = 0x4, offset = 0x4, fixed_abs, tag = 'smem constant byte address 0x4 - core index']
  #allocation1 [shape = 'u32[72,128]{1,0:T(1,128)}', space=vmem, size = 0x9000, scoped, tag = 'internal scratch']
  %s0 = inlined_call_operand.vmem [shape: bf16[2,32,384], index: 0, kind: input, shape index: {}]
  %s1 = inlined_call_operand.vmem [shape: bf16[2,32,384], index: 1, kind: input, shape index: {}]
  %s2 = inlined_call_operand.vmem [shape: bf16[32,576], index: 2, kind: input, shape index: {}]
  %s3 = inlined_call_operand.vmem [shape: bf16[16,288], index: 3, kind: input, shape index: {}]
  %s4 = inlined_call_operand.vmem [shape: bf16[32,144], index: 4, kind: input, shape index: {}]
  %s5 = inlined_call_operand.vmem [shape: f32[32,1], index: 5, kind: input, shape index: {}]
  %s6 = inlined_call_operand.vmem [shape: f32[16,1], index: 6, kind: input, shape index: {}]
  %s7 = inlined_call_operand.vmem [shape: f32[32,1], index: 7, kind: input, shape index: {}]
  %s8 = inlined_call_operand.vmem [shape: f32[1,384], index: 8, kind: input, shape index: {}]
  %s9 = inlined_call_operand.vmem [shape: f32[2,32,384], index: 9, kind: output, shape index: {}]
  %s10 = sld [smem:[#allocation0]]
  $region69: #{a_call__.1} parent=0
    _
  %s12 = ssub.s32 1, %s10
  %s13 = scalar_select 0, %s12, %s10
  loop: start=0, step=1, limit=4
  $region2: #{a_call__.1} parent=0 // loop_pre_header
    _
  $region3: #{a_call__.1} parent=0 // loop_header
    %s15 = sphi 0, %s19
    %p16 = scmp.ge.s32.totalorder %s15, 4
    %s25 = sphi 0, %s27
    %s28 = sphi 0, %s25
    %s29 = sphi 0, %s28
    %s45 = sphi 0, %s29
    %s51 = sphi 0, %s53
    %s54 = sphi 0, %s51
    %s55 = sphi 0, %s54
    %s71 = sphi 0, %s55
    %s75 = sphi 0, %s75
    %s77 = sphi 0, %s75
    %s78 = sphi 0, %s77
    %s92 = sphi 0, %s78
    %s96 = sphi 0, %s96
    %s98 = sphi 0, %s96
    %s99 = sphi 0, %s98
    %s113 = sphi 0, %s99
    %s117 = sphi 0, %s117
    %s119 = sphi 0, %s117
    %s120 = sphi 0, %s119
    %s134 = sphi 0, %s120
    %s138 = sphi 0, %s138
    %s140 = sphi 0, %s138
    %s141 = sphi 0, %s140
    %s155 = sphi 0, %s141
    %s159 = sphi 0, %s159
    %s161 = sphi 0, %s159
    %s162 = sphi 0, %s161
    %s176 = sphi 0, %s162
    %s180 = sphi 0, %s180
    %s182 = sphi 0, %s180
    %s183 = sphi 0, %s182
    %s197 = sphi 0, %s183
    %s201 = sphi 0, %s201
    %s203 = sphi 0, %s201
    %s204 = sphi 0, %s203
    %s218 = sphi 0, %s204
    %s224 = sphi 0, %s226
    %s227 = sphi 0, %s224
    %s228 = sphi 0, %s227
    %s244 = sphi 0, %s228
  $region4: #{a_call__.1} parent=0 // loop_header_branch
    %18 = sbr.rel (%p16) target = $region8
  $region5: #{a_call__.1} parent=0 // loop_body
    %s20 = ssub.s32 %s15, 1
    %s21 = ssub.s32 %s15, 2
    %s22 = sadd.s32 %s15, 1
    %s23 = ssub.s32 %s15, %s22
    %p24 = scmp.eq.s32.totalorder %s23, 0
    %s26 = sadd.s32 %s25, 1
    %s27 = scalar_select %p24, %s25, %s26
    %p30 = pneg %p24
    %p31 = scmp.eq.s32.totalorder %s15, 1
    %p32 = por %p30, %p31
    %p33 = scmp.ne.s32.totalorder %s25, %s28
    %p34 = scmp.eq.s32.totalorder %s15, 0
    %p35 = por %p33, %p34
    %p36 = scmp.ne.s32.totalorder %s25, %s28
    %p37 = scmp.eq.s32.totalorder %s20, 1
    %p38 = por %p36, %p37
    %p39 = scmp.ne.s32.totalorder %s28, %s29
    %p40 = scmp.eq.s32.totalorder %s20, 0
    %p41 = por %p39, %p40
    %p42 = scmp.ne.s32.totalorder %s28, %s29
    %p43 = scmp.eq.s32.totalorder %s21, 1
    %p44 = por %p42, %p43
    %p46 = scmp.ne.s32.totalorder %s29, %s45
    %p47 = scmp.eq.s32.totalorder %s21, 0
    %p48 = por %p46, %p47
    %s49 = ssub.s32 %s15, %s22
    %p50 = scmp.eq.s32.totalorder %s49, 0
    %s52 = sadd.s32 %s51, 1
    %s53 = scalar_select %p50, %s51, %s52
    %p56 = pneg %p50
    %p57 = scmp.eq.s32.totalorder %s15, 1
    %p58 = por %p56, %p57
    %p59 = scmp.ne.s32.totalorder %s51, %s54
    %p60 = scmp.eq.s32.totalorder %s15, 0
    %p61 = por %p59, %p60
    %p62 = scmp.ne.s32.totalorder %s51, %s54
    %p63 = scmp.eq.s32.totalorder %s20, 1
    %p64 = por %p62, %p63
    %p65 = scmp.ne.s32.totalorder %s54, %s55
    %p66 = scmp.eq.s32.totalorder %s20, 0
    %p67 = por %p65, %p66
    %p68 = scmp.ne.s32.totalorder %s54, %s55
    %p69 = scmp.eq.s32.totalorder %s21, 1
    %p70 = por %p68, %p69
    %p72 = scmp.ne.s32.totalorder %s55, %s71
    %p73 = scmp.eq.s32.totalorder %s21, 0
    %p74 = por %p72, %p73
    %s76 = sadd.s32 %s75, 1
    %p79 = scmp.eq.s32.totalorder %s15, 1
    %p80 = scmp.ne.s32.totalorder %s75, %s77
    %p81 = scmp.eq.s32.totalorder %s15, 0
    %p82 = por %p80, %p81
    %p83 = scmp.ne.s32.totalorder %s75, %s77
    %p84 = scmp.eq.s32.totalorder %s20, 1
    %p85 = por %p83, %p84
    %p86 = scmp.ne.s32.totalorder %s77, %s78
    %p87 = scmp.eq.s32.totalorder %s20, 0
    %p88 = por %p86, %p87
    %p89 = scmp.ne.s32.totalorder %s77, %s78
    %p90 = scmp.eq.s32.totalorder %s21, 1
    %p91 = por %p89, %p90
    %p93 = scmp.ne.s32.totalorder %s78, %s92
    %p94 = scmp.eq.s32.totalorder %s21, 0
    %p95 = por %p93, %p94
    %s97 = sadd.s32 %s96, 1
    %p100 = scmp.eq.s32.totalorder %s15, 1
    %p101 = scmp.ne.s32.totalorder %s96, %s98
    %p102 = scmp.eq.s32.totalorder %s15, 0
    %p103 = por %p101, %p102
    %p104 = scmp.ne.s32.totalorder %s96, %s98
    %p105 = scmp.eq.s32.totalorder %s20, 1
    %p106 = por %p104, %p105
    %p107 = scmp.ne.s32.totalorder %s98, %s99
    %p108 = scmp.eq.s32.totalorder %s20, 0
    %p109 = por %p107, %p108
    %p110 = scmp.ne.s32.totalorder %s98, %s99
    %p111 = scmp.eq.s32.totalorder %s21, 1
    %p112 = por %p110, %p111
    %p114 = scmp.ne.s32.totalorder %s99, %s113
    %p115 = scmp.eq.s32.totalorder %s21, 0
    %p116 = por %p114, %p115
    %s118 = sadd.s32 %s117, 1
    %p121 = scmp.eq.s32.totalorder %s15, 1
    %p122 = scmp.ne.s32.totalorder %s117, %s119
    %p123 = scmp.eq.s32.totalorder %s15, 0
    %p124 = por %p122, %p123
    %p125 = scmp.ne.s32.totalorder %s117, %s119
    %p126 = scmp.eq.s32.totalorder %s20, 1
    %p127 = por %p125, %p126
    %p128 = scmp.ne.s32.totalorder %s119, %s120
    %p129 = scmp.eq.s32.totalorder %s20, 0
    %p130 = por %p128, %p129
    %p131 = scmp.ne.s32.totalorder %s119, %s120
    %p132 = scmp.eq.s32.totalorder %s21, 1
    %p133 = por %p131, %p132
    %p135 = scmp.ne.s32.totalorder %s120, %s134
    %p136 = scmp.eq.s32.totalorder %s21, 0
    %p137 = por %p135, %p136
    %s139 = sadd.s32 %s138, 1
    %p142 = scmp.eq.s32.totalorder %s15, 1
    %p143 = scmp.ne.s32.totalorder %s138, %s140
    %p144 = scmp.eq.s32.totalorder %s15, 0
    %p145 = por %p143, %p144
    %p146 = scmp.ne.s32.totalorder %s138, %s140
    %p147 = scmp.eq.s32.totalorder %s20, 1
    %p148 = por %p146, %p147
    %p149 = scmp.ne.s32.totalorder %s140, %s141
    %p150 = scmp.eq.s32.totalorder %s20, 0
    %p151 = por %p149, %p150
    %p152 = scmp.ne.s32.totalorder %s140, %s141
    %p153 = scmp.eq.s32.totalorder %s21, 1
    %p154 = por %p152, %p153
    %p156 = scmp.ne.s32.totalorder %s141, %s155
    %p157 = scmp.eq.s32.totalorder %s21, 0
    %p158 = por %p156, %p157
    %s160 = sadd.s32 %s159, 1
    %p163 = scmp.eq.s32.totalorder %s15, 1
    %p164 = scmp.ne.s32.totalorder %s159, %s161
    %p165 = scmp.eq.s32.totalorder %s15, 0
    %p166 = por %p164, %p165
    %p167 = scmp.ne.s32.totalorder %s159, %s161
    %p168 = scmp.eq.s32.totalorder %s20, 1
    %p169 = por %p167, %p168
    %p170 = scmp.ne.s32.totalorder %s161, %s162
    %p171 = scmp.eq.s32.totalorder %s20, 0
    %p172 = por %p170, %p171
    %p173 = scmp.ne.s32.totalorder %s161, %s162
    %p174 = scmp.eq.s32.totalorder %s21, 1
    %p175 = por %p173, %p174
    %p177 = scmp.ne.s32.totalorder %s162, %s176
    %p178 = scmp.eq.s32.totalorder %s21, 0
    %p179 = por %p177, %p178
    %s181 = sadd.s32 %s180, 1
    %p184 = scmp.eq.s32.totalorder %s15, 1
    %p185 = scmp.ne.s32.totalorder %s180, %s182
    %p186 = scmp.eq.s32.totalorder %s15, 0
    %p187 = por %p185, %p186
    %p188 = scmp.ne.s32.totalorder %s180, %s182
    %p189 = scmp.eq.s32.totalorder %s20, 1
    %p190 = por %p188, %p189
    %p191 = scmp.ne.s32.totalorder %s182, %s183
    %p192 = scmp.eq.s32.totalorder %s20, 0
    %p193 = por %p191, %p192
    %p194 = scmp.ne.s32.totalorder %s182, %s183
    %p195 = scmp.eq.s32.totalorder %s21, 1
    %p196 = por %p194, %p195
    %p198 = scmp.ne.s32.totalorder %s183, %s197
    %p199 = scmp.eq.s32.totalorder %s21, 0
    %p200 = por %p198, %p199
    %s202 = sadd.s32 %s201, 1
    %p205 = scmp.eq.s32.totalorder %s15, 1
    %p206 = scmp.ne.s32.totalorder %s201, %s203
    %p207 = scmp.eq.s32.totalorder %s15, 0
    %p208 = por %p206, %p207
    %p209 = scmp.ne.s32.totalorder %s201, %s203
    %p210 = scmp.eq.s32.totalorder %s20, 1
    %p211 = por %p209, %p210
    %p212 = scmp.ne.s32.totalorder %s203, %s204
    %p213 = scmp.eq.s32.totalorder %s20, 0
    %p214 = por %p212, %p213
    %p215 = scmp.ne.s32.totalorder %s203, %s204
    %p216 = scmp.eq.s32.totalorder %s21, 1
    %p217 = por %p215, %p216
    %p219 = scmp.ne.s32.totalorder %s204, %s218
    %p220 = scmp.eq.s32.totalorder %s21, 0
    %p221 = por %p219, %p220
    %s222 = ssub.s32 %s15, %s22
    %p223 = scmp.eq.s32.totalorder %s222, 0
    %s225 = sadd.s32 %s224, 1
    %s226 = scalar_select %p223, %s224, %s225
    %p229 = pneg %p223
    %p230 = scmp.eq.s32.totalorder %s15, 1
    %p231 = por %p229, %p230
    %p232 = scmp.ne.s32.totalorder %s224, %s227
    %p233 = scmp.eq.s32.totalorder %s15, 0
    %p234 = por %p232, %p233
    %p235 = scmp.ne.s32.totalorder %s224, %s227
    %p236 = scmp.eq.s32.totalorder %s20, 1
    %p237 = por %p235, %p236
    %p238 = scmp.ne.s32.totalorder %s227, %s228
    %p239 = scmp.eq.s32.totalorder %s20, 0
    %p240 = por %p238, %p239
    %p241 = scmp.ne.s32.totalorder %s227, %s228
    %p242 = scmp.eq.s32.totalorder %s21, 1
    %p243 = por %p241, %p242
    %p245 = scmp.ne.s32.totalorder %s228, %s244
    %p246 = scmp.eq.s32.totalorder %s21, 0
    %p247 = por %p245, %p246
    %p248 = scmp.le.s32.totalorder 1, %s15
    %p249 = scmp.lt.s32.totalorder %s15, 3
    %p250 = pnand %p248, %p249
    %p251 = pneg %p250
    // Predicated region
    $region9: #{a_call__.1} parent=5 // pred_check
      _
    $region10: #{a_call__.1} parent=5 // pred_check_branch
      %253 = sbr.rel (%p250) target = $region12
    $region11: #{a_call__.1} parent=5 // pred_region
      %s254 = ssub.s32 %s15, 1
      // Predicated region
      $region13: #{a_call__.1} parent=11 // pred_check
        %p255 = pneg %p88
      $region14: #{a_call__.1} parent=11 // pred_check_branch
        %257 = sbr.rel (%p255) target = $region16
      $region15: #{a_call__.1} parent=11 // pred_region
        _
      $region16: #{a_call__.1} parent=11 // pred_fallthru
        _
      // Predicated region
      $region17: #{a_call__.1} parent=11 // pred_check
        %p258 = pneg %p109
      $region18: #{a_call__.1} parent=11 // pred_check_branch
        %260 = sbr.rel (%p258) target = $region20
      $region19: #{a_call__.1} parent=11 // pred_region
        _
      $region20: #{a_call__.1} parent=11 // pred_fallthru
        _
      // Predicated region
      $region21: #{a_call__.1} parent=11 // pred_check
        %p261 = pneg %p130
      $region22: #{a_call__.1} parent=11 // pred_check_branch
        %263 = sbr.rel (%p261) target = $region24
      $region23: #{a_call__.1} parent=11 // pred_region
        _
      $region24: #{a_call__.1} parent=11 // pred_fallthru
        _
      // Predicated region
      $region25: #{a_call__.1} parent=11 // pred_check
        %p264 = pneg %p151
      $region26: #{a_call__.1} parent=11 // pred_check_branch
        %266 = sbr.rel (%p264) target = $region28
      $region27: #{a_call__.1} parent=11 // pred_region
        _
      $region28: #{a_call__.1} parent=11 // pred_fallthru
        _
      // Predicated region
      $region29: #{a_call__.1} parent=11 // pred_check
        %p267 = pneg %p172
      $region30: #{a_call__.1} parent=11 // pred_check_branch
        %269 = sbr.rel (%p267) target = $region32
      $region31: #{a_call__.1} parent=11 // pred_region
        _
      $region32: #{a_call__.1} parent=11 // pred_fallthru
        _
      // Predicated region
      $region33: #{a_call__.1} parent=11 // pred_check
        %p270 = pneg %p193
      $region34: #{a_call__.1} parent=11 // pred_check_branch
        %272 = sbr.rel (%p270) target = $region36
      $region35: #{a_call__.1} parent=11 // pred_region
        _
      $region36: #{a_call__.1} parent=11 // pred_fallthru
        _
      // Predicated region
      $region37: #{a_call__.1} parent=11 // pred_check
        %p273 = pneg %p214
      $region38: #{a_call__.1} parent=11 // pred_check_branch
        %275 = sbr.rel (%p273) target = $region40
      $region39: #{a_call__.1} parent=11 // pred_region
        _
      $region40: #{a_call__.1} parent=11 // pred_fallthru
        _
    $region12: #{a_call__.1} parent=5 // pred_fallthru
      _
    %p276 = scmp.lt.s32.totalorder %s15, 2
    // Predicated region
    $region41: #{a_call__.1} parent=5 // pred_check
      %p277 = pneg %p276
    $region42: #{a_call__.1} parent=5 // pred_check_branch
      %279 = sbr.rel (%p277) target = $region44
    $region43: #{a_call__.1} parent=5 // pred_region
      // Predicated region
      $region45: #{a_call__.1} parent=43 // pred_check
        %p280 = pneg %p35
      $region46: #{a_call__.1} parent=43 // pred_check_branch
        %282 = sbr.rel (%p280) target = $region48
      $region47: #{a_call__.1} parent=43 // pred_region
        %p283 = scmp.lt.s32.totalorder %s15, 1
        %s284 = scalar_select %p283, %s15, 1
        %s285 = smul.addr %s284, 12
        %s286 = smul.addr %s285, 4
        %s287 = scalar_lea.vmem %s0, %s286
      $region48: #{a_call__.1} parent=43 // pred_fallthru
        _
      // Predicated region
      $region49: #{a_call__.1} parent=43 // pred_check
        %p288 = pneg %p61
      $region50: #{a_call__.1} parent=43 // pred_check_branch
        %290 = sbr.rel (%p288) target = $region52
      $region51: #{a_call__.1} parent=43 // pred_region
        %p291 = scmp.lt.s32.totalorder %s15, 1
        %s292 = scalar_select %p291, %s15, 1
        %s293 = smul.addr %s292, 12
        %s294 = smul.addr %s293, 4
        %s295 = scalar_lea.vmem %s1, %s294
      $region52: #{a_call__.1} parent=43 // pred_fallthru
        _
    $region44: #{a_call__.1} parent=5 // pred_fallthru
      _
    %p296 = scmp.le.s32.totalorder 1, %s15
    %p297 = scmp.lt.s32.totalorder %s15, 3
    %p298 = pnand %p296, %p297
    %p299 = pneg %p298
    // Predicated region
    $region53: #{a_call__.1} parent=5 // pred_check
      _
    $region54: #{a_call__.1} parent=5 // pred_check_branch
      %301 = sbr.rel (%p298) target = $region56
    $region55: #{a_call__.1} parent=5 // pred_region
      %s302 = ssub.s32 %s15, 1
      %p303 = scmp.lt.s32.totalorder %s20, 1
      %s304 = scalar_select %p303, %s20, 1
      %s305 = smul.addr %s304, 12
      %s306 = smul.addr %s305, 4
      %s307 = scalar_lea.vmem %s0, %s306
      %p308 = pneg %p41
      %p309 = pneg %p38
      %p310 = scmp.lt.s32.totalorder %s20, 1
      %s311 = scalar_select %p310, %s20, 1
      %s312 = smul.addr %s311, 12
      %s313 = smul.addr %s312, 4
      %s314 = scalar_lea.vmem %s1, %s313
      %p315 = pneg %p67
      %p316 = pneg %p64
      %p317 = pneg %p88
      %p318 = pneg %p85
      %p319 = pneg %p109
      %p320 = pneg %p106
      %p321 = pneg %p130
      %p322 = pneg %p127
      %p323 = pneg %p151
      %p324 = pneg %p148
      %p325 = pneg %p172
      %p326 = pneg %p169
      %p327 = pneg %p193
      %p328 = pneg %p190
      %p329 = pneg %p214
      %p330 = pneg %p211
      %p331 = pneg %p240
      %p332 = pneg %p237
      %p333 = scmp.lt.s32.totalorder %s20, 1
      %s334 = scalar_select %p333, %s20, 1
      %s335 = smul.addr %s334, 12
      %s336 = smul.addr %s335, 8
      %s337 = scalar_lea.vmem %s9, %s336
      %p338 = scmp.lt.s32.totalorder %s20, 1
      %s339 = scalar_select %p338, %s20, 1
      %s340 = smul.addr %s339, 12
      %s341 = smul.addr %s340, 4
      %s342 = scalar_lea.vmem %s0, %s341
      %p343 = scmp.lt.s32.totalorder %s20, 1
      %s344 = scalar_select %p343, %s20, 1
      %s345 = smul.addr %s344, 12
      %s346 = smul.addr %s345, 4
      %s347 = scalar_lea.vmem %s1, %s346
      %p348 = scmp.lt.s32.totalorder %s20, 1
      %s349 = scalar_select %p348, %s20, 1
      %s350 = smul.addr %s349, 12
      %s351 = smul.addr %s350, 8
      %s352 = scalar_lea.vmem %s9, %s351
      %v354 = vld [vmem:[%s8] sm:$0x7]
      %v355 = vld [vmem:[%s342] sm:$0xff]
      %v356 = vld [vmem:[%s342 + $0x8] sm:$0xf]
      %v357 = vld [vmem:[%s342 + $0xc] sm:$0xff]
      %v358 = vld [vmem:[%s342 + $0x14] sm:$0xf]
      %v359 = vld [vmem:[%s342 + $0x18] sm:$0xff]
      %v360 = vld [vmem:[%s342 + $0x20] sm:$0xf]
      %v361 = vld [vmem:[%s342 + $0x24] sm:$0xff]
      %v362 = vld [vmem:[%s342 + $0x2c] sm:$0xf]
      %v363 = vld [vmem:[%s347] sm:$0xff]
      %v364 = vld [vmem:[%s347 + $0x8] sm:$0xf]
      %v365 = vld [vmem:[%s347 + $0xc] sm:$0xff]
      %v366 = vld [vmem:[%s347 + $0x14] sm:$0xf]
      %v367 = vld [vmem:[%s347 + $0x18] sm:$0xff]
      %v368 = vld [vmem:[%s347 + $0x20] sm:$0xf]
      %v369 = vld [vmem:[%s347 + $0x24] sm:$0xff]
      %v370 = vld [vmem:[%s347 + $0x2c] sm:$0xf]
      %v379 = vunpack.c.l.b16 %v355
      %v380 = vunpack.c.h.b16 %v355
      %v381 = vunpack.c.l.b16 %v356
      %v382 = vunpack.c.l.b16 %v357
      %v383 = vunpack.c.h.b16 %v357
      %v384 = vunpack.c.l.b16 %v358
      %v385 = vunpack.c.l.b16 %v359
      %v386 = vunpack.c.h.b16 %v359
      %v387 = vunpack.c.l.b16 %v360
      %v388 = vunpack.c.l.b16 %v361
      %v389 = vunpack.c.h.b16 %v361
      %v390 = vunpack.c.l.b16 %v362
      %v391 = vpack.c.b16 %v382, %v379
      %v392 = vpack.c.b16 %v383, %v380
      %v393 = vpack.c.b16 %v384, %v381
      %v394 = vpack.c.b16 %v388, %v385
      %v395 = vpack.c.b16 %v389, %v386
      %v396 = vpack.c.b16 %v390, %v387
      %v405 = vunpack.c.l.b16 %v363
      %v406 = vunpack.c.h.b16 %v363
      %v407 = vunpack.c.l.b16 %v364
      %v408 = vunpack.c.l.b16 %v365
      %v409 = vunpack.c.h.b16 %v365
      %v410 = vunpack.c.l.b16 %v366
      %v411 = vunpack.c.l.b16 %v367
      %v412 = vunpack.c.h.b16 %v367
      %v413 = vunpack.c.l.b16 %v368
      %v414 = vunpack.c.l.b16 %v369
      %v415 = vunpack.c.h.b16 %v369
      %v416 = vunpack.c.l.b16 %v370
      %v417 = vpack.c.b16 %v408, %v405
      %v418 = vpack.c.b16 %v409, %v406
      %v419 = vpack.c.b16 %v410, %v407
      %v420 = vpack.c.b16 %v414, %v411
      %v421 = vpack.c.b16 %v415, %v412
      %v422 = vpack.c.b16 %v416, %v413
      %423 = vrot.lane.b32.xlu0 %v393, 127
      %v424 = vpop.permute.xlu0 %423
      %425 = vrot.lane.b32.xlu0 %v391, 127
      %v426 = vpop.permute.xlu0 %425
      %427 = vrot.lane.b32.xlu0 %v392, 127
      %v428 = vpop.permute.xlu0 %427
      %429 = vrot.lane.b32.xlu0 %v396, 127
      %v430 = vpop.permute.xlu0 %429
      %431 = vrot.lane.b32.xlu0 %v394, 127
      %v432 = vpop.permute.xlu0 %431
      %433 = vrot.lane.b32.xlu0 %v395, 127
      %v434 = vpop.permute.xlu0 %433
      %435 = vrot.lane.b32.xlu0 %v419, 127
      %v436 = vpop.permute.xlu0 %435
      %437 = vrot.lane.b32.xlu0 %v417, 127
      %v438 = vpop.permute.xlu0 %437
      %439 = vrot.lane.b32.xlu0 %v418, 127
      %v440 = vpop.permute.xlu0 %439
      %441 = vrot.lane.b32.xlu0 %v422, 127
      %v442 = vpop.permute.xlu0 %441
      %443 = vrot.lane.b32.xlu0 %v420, 127
      %v444 = vpop.permute.xlu0 %443
      %445 = vrot.lane.b32.xlu0 %v421, 127
      %v446 = vpop.permute.xlu0 %445
      %vm447 = vcmask 1039360
      %v448 = vsel %vm447, %v424, %v426
      %v449 = vsel %vm447, %v426, %v428
      %v450 = vsel %vm447, %v428, %v424
      %v451 = vsel %vm447, %v430, %v432
      %v452 = vsel %vm447, %v432, %v434
      %v453 = vsel %vm447, %v434, %v430
      %v454 = vsel %vm447, %v436, %v438
      %v455 = vsel %vm447, %v438, %v440
      %v456 = vsel %vm447, %v440, %v436
      %v457 = vsel %vm447, %v442, %v444
      %v458 = vsel %vm447, %v444, %v446
      %v459 = vsel %vm447, %v446, %v442
      %460 = vrot.lane.b32.xlu0 %v393, 126
      %v461 = vpop.permute.xlu0 %460
      %462 = vrot.lane.b32.xlu0 %v391, 126
      %v463 = vpop.permute.xlu0 %462
      %464 = vrot.lane.b32.xlu0 %v392, 126
      %v465 = vpop.permute.xlu0 %464
      %466 = vrot.lane.b32.xlu0 %v396, 126
      %v467 = vpop.permute.xlu0 %466
      %468 = vrot.lane.b32.xlu0 %v394, 126
      %v469 = vpop.permute.xlu0 %468
      %470 = vrot.lane.b32.xlu0 %v395, 126
      %v471 = vpop.permute.xlu0 %470
      %472 = vrot.lane.b32.xlu0 %v419, 126
      %v473 = vpop.permute.xlu0 %472
      %474 = vrot.lane.b32.xlu0 %v417, 126
      %v475 = vpop.permute.xlu0 %474
      %476 = vrot.lane.b32.xlu0 %v418, 126
      %v477 = vpop.permute.xlu0 %476
      %478 = vrot.lane.b32.xlu0 %v422, 126
      %v479 = vpop.permute.xlu0 %478
      %480 = vrot.lane.b32.xlu0 %v420, 126
      %v481 = vpop.permute.xlu0 %480
      %482 = vrot.lane.b32.xlu0 %v421, 126
      %v483 = vpop.permute.xlu0 %482
      %vm484 = vcmask 1031168
      %v485 = vsel %vm484, %v461, %v463
      %v486 = vsel %vm484, %v463, %v465
      %v487 = vsel %vm484, %v465, %v461
      %v488 = vsel %vm484, %v467, %v469
      %v489 = vsel %vm484, %v469, %v471
      %v490 = vsel %vm484, %v471, %v467
      %v491 = vsel %vm484, %v473, %v475
      %v492 = vsel %vm484, %v475, %v477
      %v493 = vsel %vm484, %v477, %v473
      %v494 = vsel %vm484, %v479, %v481
      %v495 = vsel %vm484, %v481, %v483
      %v496 = vsel %vm484, %v483, %v479
      %497 = vrot.lane.b32.xlu0 %v393, 110
      %v498 = vpop.permute.xlu0 %497
      %499 = vrot.lane.b32.xlu0 %v391, 110
      %v500 = vpop.permute.xlu0 %499
      %501 = vrot.lane.b32.xlu0 %v392, 110
      %v502 = vpop.permute.xlu0 %501
      %503 = vrot.lane.b32.xlu0 %v396, 110
      %v504 = vpop.permute.xlu0 %503
      %505 = vrot.lane.b32.xlu0 %v394, 110
      %v506 = vpop.permute.xlu0 %505
      %507 = vrot.lane.b32.xlu0 %v395, 110
      %v508 = vpop.permute.xlu0 %507
      %509 = vrot.lane.b32.xlu0 %v419, 110
      %v510 = vpop.permute.xlu0 %509
      %511 = vrot.lane.b32.xlu0 %v417, 110
      %v512 = vpop.permute.xlu0 %511
      %513 = vrot.lane.b32.xlu0 %v418, 110
      %v514 = vpop.permute.xlu0 %513
      %515 = vrot.lane.b32.xlu0 %v422, 110
      %v516 = vpop.permute.xlu0 %515
      %517 = vrot.lane.b32.xlu0 %v420, 110
      %v518 = vpop.permute.xlu0 %517
      %519 = vrot.lane.b32.xlu0 %v421, 110
      %v520 = vpop.permute.xlu0 %519
      %vm521 = vcmask 900096
      %v522 = vsel %vm521, %v498, %v500
      %v523 = vsel %vm521, %v500, %v502
      %v524 = vsel %vm521, %v502, %v498
      %v525 = vsel %vm521, %v504, %v506
      %v526 = vsel %vm521, %v506, %v508
      %v527 = vsel %vm521, %v508, %v504
      %v528 = vsel %vm521, %v510, %v512
      %v529 = vsel %vm521, %v512, %v514
      %v530 = vsel %vm521, %v514, %v510
      %v531 = vsel %vm521, %v516, %v518
      %v532 = vsel %vm521, %v518, %v520
      %v533 = vsel %vm521, %v520, %v516
      %534 = vrot.lane.b32.xlu0 %v391, 109
      %v535 = vpop.permute.xlu0 %534
      %536 = vrot.lane.b32.xlu0 %v392, 109
      %v537 = vpop.permute.xlu0 %536
      %538 = vrot.lane.b32.xlu0 %v393, 109
      %v539 = vpop.permute.xlu0 %538
      %540 = vrot.lane.b32.xlu0 %v394, 109
      %v541 = vpop.permute.xlu0 %540
      %542 = vrot.lane.b32.xlu0 %v395, 109
      %v543 = vpop.permute.xlu0 %542
      %544 = vrot.lane.b32.xlu0 %v396, 109
      %v545 = vpop.permute.xlu0 %544
      %546 = vrot.lane.b32.xlu0 %v417, 109
      %v547 = vpop.permute.xlu0 %546
      %548 = vrot.lane.b32.xlu0 %v418, 109
      %v549 = vpop.permute.xlu0 %548
      %550 = vrot.lane.b32.xlu0 %v419, 109
      %v551 = vpop.permute.xlu0 %550
      %552 = vrot.lane.b32.xlu0 %v420, 109
      %v553 = vpop.permute.xlu0 %552
      %554 = vrot.lane.b32.xlu0 %v421, 109
      %v555 = vpop.permute.xlu0 %554
      %556 = vrot.lane.b32.xlu0 %v422, 109
      %v557 = vpop.permute.xlu0 %556
      %vm558 = vcmask 891904
      %v559 = vsel %vm558, %v535, %v537
      %v560 = vsel %vm558, %v537, %v539
      %v561 = vsel %vm558, %v541, %v543
      %v562 = vsel %vm558, %v543, %v545
      %v563 = vsel %vm558, %v547, %v549
      %v564 = vsel %vm558, %v549, %v551
      %v565 = vsel %vm558, %v553, %v555
      %v566 = vsel %vm558, %v555, %v557
      %567 = vrot.lane.b32.xlu0 %v391, 108
      %v568 = vpop.permute.xlu0 %567
      %569 = vrot.lane.b32.xlu0 %v392, 108
      %v570 = vpop.permute.xlu0 %569
      %571 = vrot.lane.b32.xlu0 %v393, 108
      %v572 = vpop.permute.xlu0 %571
      %573 = vrot.lane.b32.xlu0 %v394, 108
      %v574 = vpop.permute.xlu0 %573
      %575 = vrot.lane.b32.xlu0 %v395, 108
      %v576 = vpop.permute.xlu0 %575
      %577 = vrot.lane.b32.xlu0 %v396, 108
      %v578 = vpop.permute.xlu0 %577
      %579 = vrot.lane.b32.xlu0 %v417, 108
      %v580 = vpop.permute.xlu0 %579
      %581 = vrot.lane.b32.xlu0 %v418, 108
      %v582 = vpop.permute.xlu0 %581
      %583 = vrot.lane.b32.xlu0 %v419, 108
      %v584 = vpop.permute.xlu0 %583
      %585 = vrot.lane.b32.xlu0 %v420, 108
      %v586 = vpop.permute.xlu0 %585
      %587 = vrot.lane.b32.xlu0 %v421, 108
      %v588 = vpop.permute.xlu0 %587
      %589 = vrot.lane.b32.xlu0 %v422, 108
      %v590 = vpop.permute.xlu0 %589
      %vm591 = vcmask 883712
      %v592 = vsel %vm591, %v568, %v570
      %v593 = vsel %vm591, %v570, %v572
      %v594 = vsel %vm591, %v572, %v568
      %v595 = vsel %vm591, %v574, %v576
      %v596 = vsel %vm591, %v576, %v578
      %v597 = vsel %vm591, %v578, %v574
      %v598 = vsel %vm591, %v580, %v582
      %v599 = vsel %vm591, %v582, %v584
      %v600 = vsel %vm591, %v584, %v580
      %v601 = vsel %vm591, %v586, %v588
      %v602 = vsel %vm591, %v588, %v590
      %v603 = vsel %vm591, %v590, %v586
      %604 = vrot.lane.b32.xlu0 %v391, 92
      %v605 = vpop.permute.xlu0 %604
      %606 = vrot.lane.b32.xlu0 %v392, 92
      %v607 = vpop.permute.xlu0 %606
      %608 = vrot.lane.b32.xlu0 %v393, 92
      %v609 = vpop.permute.xlu0 %608
      %610 = vrot.lane.b32.xlu0 %v394, 92
      %v611 = vpop.permute.xlu0 %610
      %612 = vrot.lane.b32.xlu0 %v395, 92
      %v613 = vpop.permute.xlu0 %612
      %614 = vrot.lane.b32.xlu0 %v396, 92
      %v615 = vpop.permute.xlu0 %614
      %616 = vrot.lane.b32.xlu0 %v417, 92
      %v617 = vpop.permute.xlu0 %616
      %618 = vrot.lane.b32.xlu0 %v418, 92
      %v619 = vpop.permute.xlu0 %618
      %620 = vrot.lane.b32.xlu0 %v419, 92
      %v621 = vpop.permute.xlu0 %620
      %622 = vrot.lane.b32.xlu0 %v420, 92
      %v623 = vpop.permute.xlu0 %622
      %624 = vrot.lane.b32.xlu0 %v421, 92
      %v625 = vpop.permute.xlu0 %624
      %626 = vrot.lane.b32.xlu0 %v422, 92
      %v627 = vpop.permute.xlu0 %626
      %vm628 = vcmask 752640
      %v629 = vsel %vm628, %v605, %v607
      %v630 = vsel %vm628, %v607, %v609
      %v631 = vsel %vm628, %v609, %v605
      %v632 = vsel %vm628, %v611, %v613
      %v633 = vsel %vm628, %v613, %v615
      %v634 = vsel %vm628, %v615, %v611
      %v635 = vsel %vm628, %v617, %v619
      %v636 = vsel %vm628, %v619, %v621
      %v637 = vsel %vm628, %v621, %v617
      %v638 = vsel %vm628, %v623, %v625
      %v639 = vsel %vm628, %v625, %v627
      %v640 = vsel %vm628, %v627, %v623
      %641 = vrot.lane.b32.xlu0 %v391, 91
      %v642 = vpop.permute.xlu0 %641
      %643 = vrot.lane.b32.xlu0 %v392, 91
      %v644 = vpop.permute.xlu0 %643
      %645 = vrot.lane.b32.xlu0 %v393, 91
      %v646 = vpop.permute.xlu0 %645
      %647 = vrot.lane.b32.xlu0 %v394, 91
      %v648 = vpop.permute.xlu0 %647
      %649 = vrot.lane.b32.xlu0 %v395, 91
      %v650 = vpop.permute.xlu0 %649
      %651 = vrot.lane.b32.xlu0 %v396, 91
      %v652 = vpop.permute.xlu0 %651
      %653 = vrot.lane.b32.xlu0 %v417, 91
      %v654 = vpop.permute.xlu0 %653
      %655 = vrot.lane.b32.xlu0 %v418, 91
      %v656 = vpop.permute.xlu0 %655
      %657 = vrot.lane.b32.xlu0 %v419, 91
      %v658 = vpop.permute.xlu0 %657
      %659 = vrot.lane.b32.xlu0 %v420, 91
      %v660 = vpop.permute.xlu0 %659
      %661 = vrot.lane.b32.xlu0 %v421, 91
      %v662 = vpop.permute.xlu0 %661
      %663 = vrot.lane.b32.xlu0 %v422, 91
      %v664 = vpop.permute.xlu0 %663
      %vm665 = vcmask 744448
      %v666 = vsel %vm665, %v642, %v644
      %v667 = vsel %vm665, %v644, %v646
      %v668 = vsel %vm665, %v646, %v642
      %v669 = vsel %vm665, %v648, %v650
      %v670 = vsel %vm665, %v650, %v652
      %v671 = vsel %vm665, %v652, %v648
      %v672 = vsel %vm665, %v654, %v656
      %v673 = vsel %vm665, %v656, %v658
      %v674 = vsel %vm665, %v658, %v654
      %v675 = vsel %vm665, %v660, %v662
      %v676 = vsel %vm665, %v662, %v664
      %v677 = vsel %vm665, %v664, %v660
      %678 = vrot.lane.b32.xlu0 %v391, 90
      %v679 = vpop.permute.xlu0 %678
      %680 = vrot.lane.b32.xlu0 %v392, 90
      %v681 = vpop.permute.xlu0 %680
      %682 = vrot.lane.b32.xlu0 %v393, 90
      %v683 = vpop.permute.xlu0 %682
      %684 = vrot.lane.b32.xlu0 %v394, 90
      %v685 = vpop.permute.xlu0 %684
      %686 = vrot.lane.b32.xlu0 %v395, 90
      %v687 = vpop.permute.xlu0 %686
      %688 = vrot.lane.b32.xlu0 %v396, 90
      %v689 = vpop.permute.xlu0 %688
      %690 = vrot.lane.b32.xlu0 %v417, 90
      %v691 = vpop.permute.xlu0 %690
      %692 = vrot.lane.b32.xlu0 %v418, 90
      %v693 = vpop.permute.xlu0 %692
      %694 = vrot.lane.b32.xlu0 %v419, 90
      %v695 = vpop.permute.xlu0 %694
      %696 = vrot.lane.b32.xlu0 %v420, 90
      %v697 = vpop.permute.xlu0 %696
      %698 = vrot.lane.b32.xlu0 %v421, 90
      %v699 = vpop.permute.xlu0 %698
      %700 = vrot.lane.b32.xlu0 %v422, 90
      %v701 = vpop.permute.xlu0 %700
      %vm702 = vcmask 736256
      %v703 = vsel %vm702, %v679, %v681
      %v704 = vsel %vm702, %v681, %v683
      %v705 = vsel %vm702, %v683, %v679
      %v706 = vsel %vm702, %v685, %v687
      %v707 = vsel %vm702, %v687, %v689
      %v708 = vsel %vm702, %v689, %v685
      %v709 = vsel %vm702, %v691, %v693
      %v710 = vsel %vm702, %v693, %v695
      %v711 = vsel %vm702, %v695, %v691
      %v712 = vsel %vm702, %v697, %v699
      %v713 = vsel %vm702, %v699, %v701
      %v714 = vsel %vm702, %v701, %v697
      %v715 = vld [vmem:[%s2] sm:$0xff]
      %v716 = vld [vmem:[%s2 + $0x8] sm:$0xff]
      %v717 = vld [vmem:[%s2 + $0x10] sm:$0xf]
      %v718 = vld [vmem:[%s2 + $0x14] sm:$0xff]
      %v719 = vld [vmem:[%s2 + $0x1c] sm:$0xff]
      %v720 = vld [vmem:[%s2 + $0x24] sm:$0xf]
      %v721 = vld [vmem:[%s2 + $0x28] sm:$0xff]
      %v722 = vld [vmem:[%s2 + $0x30] sm:$0xff]
      %v723 = vld [vmem:[%s2 + $0x38] sm:$0xf]
      %v724 = vld [vmem:[%s2 + $0x3c] sm:$0xff]
      %v725 = vld [vmem:[%s2 + $0x44] sm:$0xff]
      %v726 = vld [vmem:[%s2 + $0x4c] sm:$0xf]
      %v727 = vld [vmem:[%s5] sm:$0xff]
      %v728 = vld [vmem:[%s5 + $0x8] sm:$0xff]
      %v729 = vld [vmem:[%s5 + $0x10] sm:$0xff]
      %v730 = vld [vmem:[%s5 + $0x18] sm:$0xff]
      %732 = vset.pattern.permute.xlu0 0
      %733 = vperm.xlu0 %732, %v727
      %v734 = vpop.permute.xlu0 %733
      %737 = vset.pattern.permute.xlu0 0
      %738 = vperm.xlu0 %737, %v728
      %v739 = vpop.permute.xlu0 %738
      %742 = vset.pattern.permute.xlu0 0
      %743 = vperm.xlu0 %742, %v729
      %v744 = vpop.permute.xlu0 %743
      %747 = vset.pattern.permute.xlu0 0
      %748 = vperm.xlu0 %747, %v730
      %v749 = vpop.permute.xlu0 %748
      %v763 = vunpack.c.l.b16 %v715
      %v764 = vunpack.c.h.b16 %v715
      %v765 = vunpack.c.l.b16 %v716
      %v766 = vunpack.c.h.b16 %v716
      %v767 = vunpack.c.l.b16 %v717
      %v768 = vunpack.c.l.b16 %v718
      %v769 = vunpack.c.h.b16 %v718
      %v770 = vunpack.c.l.b16 %v719
      %v771 = vunpack.c.h.b16 %v719
      %v772 = vunpack.c.l.b16 %v720
      %v773 = vunpack.c.l.b16 %v721
      %v774 = vunpack.c.h.b16 %v721
      %v775 = vunpack.c.l.b16 %v722
      %v776 = vunpack.c.h.b16 %v722
      %v777 = vunpack.c.l.b16 %v723
      %v778 = vunpack.c.l.b16 %v724
      %v779 = vunpack.c.h.b16 %v724
      %v780 = vunpack.c.l.b16 %v725
      %v781 = vunpack.c.h.b16 %v725
      %v782 = vunpack.c.l.b16 %v726
      %v783 = vpack.c.b16 %v768, %v763
      %v784 = vpack.c.b16 %v769, %v764
      %v785 = vpack.c.b16 %v770, %v765
      %v786 = vpack.c.b16 %v771, %v766
      %v787 = vpack.c.b16 %v772, %v767
      %v788 = vpack.c.b16 %v778, %v773
      %v789 = vpack.c.b16 %v779, %v774
      %v790 = vpack.c.b16 %v780, %v775
      %v791 = vpack.c.b16 %v781, %v776
      %v792 = vpack.c.b16 %v782, %v777
      %801 = vrot.lane.b32.xlu0 %v393, 19
      %v802 = vpop.permute.xlu0 %801
      %803 = vrot.lane.b32.xlu0 %v391, 19
      %v804 = vpop.permute.xlu0 %803
      %805 = vrot.lane.b32.xlu0 %v392, 19
      %v806 = vpop.permute.xlu0 %805
      %807 = vrot.lane.b32.xlu0 %v396, 19
      %v808 = vpop.permute.xlu0 %807
      %809 = vrot.lane.b32.xlu0 %v394, 19
      %v810 = vpop.permute.xlu0 %809
      %811 = vrot.lane.b32.xlu0 %v395, 19
      %v812 = vpop.permute.xlu0 %811
      %813 = vrot.lane.b32.xlu0 %v419, 19
      %v814 = vpop.permute.xlu0 %813
      %815 = vrot.lane.b32.xlu0 %v417, 19
      %v816 = vpop.permute.xlu0 %815
      %817 = vrot.lane.b32.xlu0 %v418, 19
      %v818 = vpop.permute.xlu0 %817
      %819 = vrot.lane.b32.xlu0 %v422, 19
      %v820 = vpop.permute.xlu0 %819
      %821 = vrot.lane.b32.xlu0 %v420, 19
      %v822 = vpop.permute.xlu0 %821
      %823 = vrot.lane.b32.xlu0 %v421, 19
      %v824 = vpop.permute.xlu0 %823
      %825 = vrot.lane.b32.xlu0 %v448, 19
      %v826 = vpop.permute.xlu0 %825
      %827 = vrot.lane.b32.xlu0 %v449, 19
      %v828 = vpop.permute.xlu0 %827
      %829 = vrot.lane.b32.xlu0 %v450, 19
      %v830 = vpop.permute.xlu0 %829
      %831 = vrot.lane.b32.xlu0 %v424, 19
      %v832 = vpop.permute.xlu0 %831
      %833 = vrot.lane.b32.xlu0 %v451, 19
      %v834 = vpop.permute.xlu0 %833
      %835 = vrot.lane.b32.xlu0 %v452, 19
      %v836 = vpop.permute.xlu0 %835
      %837 = vrot.lane.b32.xlu0 %v453, 19
      %v838 = vpop.permute.xlu0 %837
      %839 = vrot.lane.b32.xlu0 %v430, 19
      %v840 = vpop.permute.xlu0 %839
      %841 = vrot.lane.b32.xlu0 %v454, 19
      %v842 = vpop.permute.xlu0 %841
      %843 = vrot.lane.b32.xlu0 %v455, 19
      %v844 = vpop.permute.xlu0 %843
      %845 = vrot.lane.b32.xlu0 %v456, 19
      %v846 = vpop.permute.xlu0 %845
      %847 = vrot.lane.b32.xlu0 %v436, 19
      %v848 = vpop.permute.xlu0 %847
      %849 = vrot.lane.b32.xlu0 %v457, 19
      %v850 = vpop.permute.xlu0 %849
      %851 = vrot.lane.b32.xlu0 %v458, 19
      %v852 = vpop.permute.xlu0 %851
      %853 = vrot.lane.b32.xlu0 %v459, 19
      %v854 = vpop.permute.xlu0 %853
      %855 = vrot.lane.b32.xlu0 %v442, 19
      %v856 = vpop.permute.xlu0 %855
      %857 = vrot.lane.b32.xlu0 %v485, 19
      %v858 = vpop.permute.xlu0 %857
      %859 = vrot.lane.b32.xlu0 %v486, 19
      %v860 = vpop.permute.xlu0 %859
      %861 = vrot.lane.b32.xlu0 %v487, 19
      %v862 = vpop.permute.xlu0 %861
      %863 = vrot.lane.b32.xlu0 %v461, 19
      %v864 = vpop.permute.xlu0 %863
      %865 = vrot.lane.b32.xlu0 %v488, 19
      %v866 = vpop.permute.xlu0 %865
      %867 = vrot.lane.b32.xlu0 %v489, 19
      %v868 = vpop.permute.xlu0 %867
      %869 = vrot.lane.b32.xlu0 %v490, 19
      %v870 = vpop.permute.xlu0 %869
      %871 = vrot.lane.b32.xlu0 %v467, 19
      %v872 = vpop.permute.xlu0 %871
      %873 = vrot.lane.b32.xlu0 %v491, 19
      %v874 = vpop.permute.xlu0 %873
      %875 = vrot.lane.b32.xlu0 %v492, 19
      %v876 = vpop.permute.xlu0 %875
      %877 = vrot.lane.b32.xlu0 %v493, 19
      %v878 = vpop.permute.xlu0 %877
      %879 = vrot.lane.b32.xlu0 %v473, 19
      %v880 = vpop.permute.xlu0 %879
      %881 = vrot.lane.b32.xlu0 %v494, 19
      %v882 = vpop.permute.xlu0 %881
      %883 = vrot.lane.b32.xlu0 %v495, 19
      %v884 = vpop.permute.xlu0 %883
      %885 = vrot.lane.b32.xlu0 %v496, 19
      %v886 = vpop.permute.xlu0 %885
      %887 = vrot.lane.b32.xlu0 %v479, 19
      %v888 = vpop.permute.xlu0 %887
      %889 = vrot.lane.b32.xlu0 %v522, 19
      %v890 = vpop.permute.xlu0 %889
      %891 = vrot.lane.b32.xlu0 %v523, 19
      %v892 = vpop.permute.xlu0 %891
      %893 = vrot.lane.b32.xlu0 %v524, 19
      %v894 = vpop.permute.xlu0 %893
      %895 = vrot.lane.b32.xlu0 %v498, 19
      %v896 = vpop.permute.xlu0 %895
      %897 = vrot.lane.b32.xlu0 %v525, 19
      %v898 = vpop.permute.xlu0 %897
      %899 = vrot.lane.b32.xlu0 %v526, 19
      %v900 = vpop.permute.xlu0 %899
      %901 = vrot.lane.b32.xlu0 %v527, 19
      %v902 = vpop.permute.xlu0 %901
      %903 = vrot.lane.b32.xlu0 %v504, 19
      %v904 = vpop.permute.xlu0 %903
      %905 = vrot.lane.b32.xlu0 %v528, 19
      %v906 = vpop.permute.xlu0 %905
      %907 = vrot.lane.b32.xlu0 %v529, 19
      %v908 = vpop.permute.xlu0 %907
      %909 = vrot.lane.b32.xlu0 %v530, 19
      %v910 = vpop.permute.xlu0 %909
      %911 = vrot.lane.b32.xlu0 %v510, 19
      %v912 = vpop.permute.xlu0 %911
      %913 = vrot.lane.b32.xlu0 %v531, 19
      %v914 = vpop.permute.xlu0 %913
      %915 = vrot.lane.b32.xlu0 %v532, 19
      %v916 = vpop.permute.xlu0 %915
      %917 = vrot.lane.b32.xlu0 %v533, 19
      %v918 = vpop.permute.xlu0 %917
      %919 = vrot.lane.b32.xlu0 %v516, 19
      %v920 = vpop.permute.xlu0 %919
      %921 = vrot.lane.b32.xlu0 %v535, 19
      %v922 = vpop.permute.xlu0 %921
      %923 = vrot.lane.b32.xlu0 %v559, 19
      %v924 = vpop.permute.xlu0 %923
      %925 = vrot.lane.b32.xlu0 %v560, 19
      %v926 = vpop.permute.xlu0 %925
      %927 = vrot.lane.b32.xlu0 %v539, 19
      %v928 = vpop.permute.xlu0 %927
      %929 = vrot.lane.b32.xlu0 %v541, 19
      %v930 = vpop.permute.xlu0 %929
      %931 = vrot.lane.b32.xlu0 %v561, 19
      %v932 = vpop.permute.xlu0 %931
      %933 = vrot.lane.b32.xlu0 %v562, 19
      %v934 = vpop.permute.xlu0 %933
      %935 = vrot.lane.b32.xlu0 %v545, 19
      %v936 = vpop.permute.xlu0 %935
      %937 = vrot.lane.b32.xlu0 %v547, 19
      %v938 = vpop.permute.xlu0 %937
      %939 = vrot.lane.b32.xlu0 %v563, 19
      %v940 = vpop.permute.xlu0 %939
      %941 = vrot.lane.b32.xlu0 %v564, 19
      %v942 = vpop.permute.xlu0 %941
      %943 = vrot.lane.b32.xlu0 %v551, 19
      %v944 = vpop.permute.xlu0 %943
      %945 = vrot.lane.b32.xlu0 %v553, 19
      %v946 = vpop.permute.xlu0 %945
      %947 = vrot.lane.b32.xlu0 %v565, 19
      %v948 = vpop.permute.xlu0 %947
      %949 = vrot.lane.b32.xlu0 %v566, 19
      %v950 = vpop.permute.xlu0 %949
      %951 = vrot.lane.b32.xlu0 %v557, 19
      %v952 = vpop.permute.xlu0 %951
      %953 = vrot.lane.b32.xlu0 %v568, 19
      %v954 = vpop.permute.xlu0 %953
      %955 = vrot.lane.b32.xlu0 %v592, 19
      %v956 = vpop.permute.xlu0 %955
      %957 = vrot.lane.b32.xlu0 %v593, 19
      %v958 = vpop.permute.xlu0 %957
      %959 = vrot.lane.b32.xlu0 %v594, 19
      %v960 = vpop.permute.xlu0 %959
      %961 = vrot.lane.b32.xlu0 %v574, 19
      %v962 = vpop.permute.xlu0 %961
      %963 = vrot.lane.b32.xlu0 %v595, 19
      %v964 = vpop.permute.xlu0 %963
      %965 = vrot.lane.b32.xlu0 %v596, 19
      %v966 = vpop.permute.xlu0 %965
      %967 = vrot.lane.b32.xlu0 %v597, 19
      %v968 = vpop.permute.xlu0 %967
      %969 = vrot.lane.b32.xlu0 %v580, 19
      %v970 = vpop.permute.xlu0 %969
      %971 = vrot.lane.b32.xlu0 %v598, 19
      %v972 = vpop.permute.xlu0 %971
      %973 = vrot.lane.b32.xlu0 %v599, 19
      %v974 = vpop.permute.xlu0 %973
      %975 = vrot.lane.b32.xlu0 %v600, 19
      %v976 = vpop.permute.xlu0 %975
      %977 = vrot.lane.b32.xlu0 %v586, 19
      %v978 = vpop.permute.xlu0 %977
      %979 = vrot.lane.b32.xlu0 %v601, 19
      %v980 = vpop.permute.xlu0 %979
      %981 = vrot.lane.b32.xlu0 %v602, 19
      %v982 = vpop.permute.xlu0 %981
      %983 = vrot.lane.b32.xlu0 %v603, 19
      %v984 = vpop.permute.xlu0 %983
      %985 = vrot.lane.b32.xlu0 %v605, 19
      %v986 = vpop.permute.xlu0 %985
      %987 = vrot.lane.b32.xlu0 %v629, 19
      %v988 = vpop.permute.xlu0 %987
      %989 = vrot.lane.b32.xlu0 %v630, 19
      %v990 = vpop.permute.xlu0 %989
      %991 = vrot.lane.b32.xlu0 %v631, 19
      %v992 = vpop.permute.xlu0 %991
      %993 = vrot.lane.b32.xlu0 %v611, 19
      %v994 = vpop.permute.xlu0 %993
      %995 = vrot.lane.b32.xlu0 %v632, 19
      %v996 = vpop.permute.xlu0 %995
      %997 = vrot.lane.b32.xlu0 %v633, 19
      %v998 = vpop.permute.xlu0 %997
      %999 = vrot.lane.b32.xlu0 %v634, 19
      %v1000 = vpop.permute.xlu0 %999
      %1001 = vrot.lane.b32.xlu0 %v617, 19
      %v1002 = vpop.permute.xlu0 %1001
      %1003 = vrot.lane.b32.xlu0 %v635, 19
      %v1004 = vpop.permute.xlu0 %1003
      %1005 = vrot.lane.b32.xlu0 %v636, 19
      %v1006 = vpop.permute.xlu0 %1005
      %1007 = vrot.lane.b32.xlu0 %v637, 19
      %v1008 = vpop.permute.xlu0 %1007
      %1009 = vrot.lane.b32.xlu0 %v623, 19
      %v1010 = vpop.permute.xlu0 %1009
      %1011 = vrot.lane.b32.xlu0 %v638, 19
      %v1012 = vpop.permute.xlu0 %1011
      %1013 = vrot.lane.b32.xlu0 %v639, 19
      %v1014 = vpop.permute.xlu0 %1013
      %1015 = vrot.lane.b32.xlu0 %v640, 19
      %v1016 = vpop.permute.xlu0 %1015
      %1017 = vrot.lane.b32.xlu0 %v642, 19
      %v1018 = vpop.permute.xlu0 %1017
      %1019 = vrot.lane.b32.xlu0 %v666, 19
      %v1020 = vpop.permute.xlu0 %1019
      %1021 = vrot.lane.b32.xlu0 %v667, 19
      %v1022 = vpop.permute.xlu0 %1021
      %1023 = vrot.lane.b32.xlu0 %v668, 19
      %v1024 = vpop.permute.xlu0 %1023
      %1025 = vrot.lane.b32.xlu0 %v648, 19
      %v1026 = vpop.permute.xlu0 %1025
      %1027 = vrot.lane.b32.xlu0 %v669, 19
      %v1028 = vpop.permute.xlu0 %1027
      %1029 = vrot.lane.b32.xlu0 %v670, 19
      %v1030 = vpop.permute.xlu0 %1029
      %1031 = vrot.lane.b32.xlu0 %v671, 19
      %v1032 = vpop.permute.xlu0 %1031
      %1033 = vrot.lane.b32.xlu0 %v654, 19
      %v1034 = vpop.permute.xlu0 %1033
      %1035 = vrot.lane.b32.xlu0 %v672, 19
      %v1036 = vpop.permute.xlu0 %1035
      %1037 = vrot.lane.b32.xlu0 %v673, 19
      %v1038 = vpop.permute.xlu0 %1037
      %1039 = vrot.lane.b32.xlu0 %v674, 19
      %v1040 = vpop.permute.xlu0 %1039
      %1041 = vrot.lane.b32.xlu0 %v660, 19
      %v1042 = vpop.permute.xlu0 %1041
      %1043 = vrot.lane.b32.xlu0 %v675, 19
      %v1044 = vpop.permute.xlu0 %1043
      %1045 = vrot.lane.b32.xlu0 %v676, 19
      %v1046 = vpop.permute.xlu0 %1045
      %1047 = vrot.lane.b32.xlu0 %v677, 19
      %v1048 = vpop.permute.xlu0 %1047
      %1049 = vrot.lane.b32.xlu0 %v679, 19
      %v1050 = vpop.permute.xlu0 %1049
      %1051 = vrot.lane.b32.xlu0 %v703, 19
      %v1052 = vpop.permute.xlu0 %1051
      %1053 = vrot.lane.b32.xlu0 %v704, 19
      %v1054 = vpop.permute.xlu0 %1053
      %1055 = vrot.lane.b32.xlu0 %v705, 19
      %v1056 = vpop.permute.xlu0 %1055
      %1057 = vrot.lane.b32.xlu0 %v685, 19
      %v1058 = vpop.permute.xlu0 %1057
      %1059 = vrot.lane.b32.xlu0 %v706, 19
      %v1060 = vpop.permute.xlu0 %1059
      %1061 = vrot.lane.b32.xlu0 %v707, 19
      %v1062 = vpop.permute.xlu0 %1061
      %1063 = vrot.lane.b32.xlu0 %v708, 19
      %v1064 = vpop.permute.xlu0 %1063
      %1065 = vrot.lane.b32.xlu0 %v691, 19
      %v1066 = vpop.permute.xlu0 %1065
      %1067 = vrot.lane.b32.xlu0 %v709, 19
      %v1068 = vpop.permute.xlu0 %1067
      %1069 = vrot.lane.b32.xlu0 %v710, 19
      %v1070 = vpop.permute.xlu0 %1069
      %1071 = vrot.lane.b32.xlu0 %v711, 19
      %v1072 = vpop.permute.xlu0 %1071
      %1073 = vrot.lane.b32.xlu0 %v697, 19
      %v1074 = vpop.permute.xlu0 %1073
      %1075 = vrot.lane.b32.xlu0 %v712, 19
      %v1076 = vpop.permute.xlu0 %1075
      %1077 = vrot.lane.b32.xlu0 %v713, 19
      %v1078 = vpop.permute.xlu0 %1077
      %1079 = vrot.lane.b32.xlu0 %v714, 19
      %v1080 = vpop.permute.xlu0 %1079
      %vm1081 = vcmask 154624
      %v1082 = vsel %vm1081, %v802, %v804
      %v1083 = vsel %vm1081, %v804, %v806
      %v1084 = vsel %vm1081, %v806, %v802
      %v1085 = vsel %vm1081, %v808, %v810
      %v1086 = vsel %vm1081, %v810, %v812
      %v1087 = vsel %vm1081, %v812, %v808
      %v1088 = vsel %vm1081, %v814, %v816
      %v1089 = vsel %vm1081, %v816, %v818
      %v1090 = vsel %vm1081, %v818, %v814
      %v1091 = vsel %vm1081, %v820, %v822
      %v1092 = vsel %vm1081, %v822, %v824
      %v1093 = vsel %vm1081, %v824, %v820
      %v1094 = vsel %vm1081, %v826, %v828
      %v1095 = vsel %vm1081, %v828, %v830
      %v1096 = vsel %vm1081, %v830, %v832
      %v1097 = vsel %vm1081, %v834, %v836
      %v1098 = vsel %vm1081, %v836, %v838
      %v1099 = vsel %vm1081, %v838, %v840
      %v1100 = vsel %vm1081, %v842, %v844
      %v1101 = vsel %vm1081, %v844, %v846
      %v1102 = vsel %vm1081, %v846, %v848
      %v1103 = vsel %vm1081, %v850, %v852
      %v1104 = vsel %vm1081, %v852, %v854
      %v1105 = vsel %vm1081, %v854, %v856
      %v1106 = vsel %vm1081, %v858, %v860
      %v1107 = vsel %vm1081, %v860, %v862
      %v1108 = vsel %vm1081, %v862, %v864
      %v1109 = vsel %vm1081, %v866, %v868
      %v1110 = vsel %vm1081, %v868, %v870
      %v1111 = vsel %vm1081, %v870, %v872
      %v1112 = vsel %vm1081, %v874, %v876
      %v1113 = vsel %vm1081, %v876, %v878
      %v1114 = vsel %vm1081, %v878, %v880
      %v1115 = vsel %vm1081, %v882, %v884
      %v1116 = vsel %vm1081, %v884, %v886
      %v1117 = vsel %vm1081, %v886, %v888
      %v1118 = vsel %vm1081, %v890, %v892
      %v1119 = vsel %vm1081, %v892, %v894
      %v1120 = vsel %vm1081, %v894, %v896
      %v1121 = vsel %vm1081, %v898, %v900
      %v1122 = vsel %vm1081, %v900, %v902
      %v1123 = vsel %vm1081, %v902, %v904
      %v1124 = vsel %vm1081, %v906, %v908
      %v1125 = vsel %vm1081, %v908, %v910
      %v1126 = vsel %vm1081, %v910, %v912
      %v1127 = vsel %vm1081, %v914, %v916
      %v1128 = vsel %vm1081, %v916, %v918
      %v1129 = vsel %vm1081, %v918, %v920
      %v1130 = vsel %vm1081, %v922, %v924
      %v1131 = vsel %vm1081, %v924, %v926
      %v1132 = vsel %vm1081, %v926, %v928
      %v1133 = vsel %vm1081, %v930, %v932
      %v1134 = vsel %vm1081, %v932, %v934
      %v1135 = vsel %vm1081, %v934, %v936
      %v1136 = vsel %vm1081, %v938, %v940
      %v1137 = vsel %vm1081, %v940, %v942
      %v1138 = vsel %vm1081, %v942, %v944
      %v1139 = vsel %vm1081, %v946, %v948
      %v1140 = vsel %vm1081, %v948, %v950
      %v1141 = vsel %vm1081, %v950, %v952
      %v1142 = vsel %vm1081, %v954, %v956
      %v1143 = vsel %vm1081, %v956, %v958
      %v1144 = vsel %vm1081, %v958, %v960
      %v1145 = vsel %vm1081, %v962, %v964
      %v1146 = vsel %vm1081, %v964, %v966
      %v1147 = vsel %vm1081, %v966, %v968
      %v1148 = vsel %vm1081, %v970, %v972
      %v1149 = vsel %vm1081, %v972, %v974
      %v1150 = vsel %vm1081, %v974, %v976
      %v1151 = vsel %vm1081, %v978, %v980
      %v1152 = vsel %vm1081, %v980, %v982
      %v1153 = vsel %vm1081, %v982, %v984
      %v1154 = vsel %vm1081, %v986, %v988
      %v1155 = vsel %vm1081, %v988, %v990
      %v1156 = vsel %vm1081, %v990, %v992
      %v1157 = vsel %vm1081, %v994, %v996
      %v1158 = vsel %vm1081, %v996, %v998
      %v1159 = vsel %vm1081, %v998, %v1000
      %v1160 = vsel %vm1081, %v1002, %v1004
      %v1161 = vsel %vm1081, %v1004, %v1006
      %v1162 = vsel %vm1081, %v1006, %v1008
      %v1163 = vsel %vm1081, %v1010, %v1012
      %v1164 = vsel %vm1081, %v1012, %v1014
      %v1165 = vsel %vm1081, %v1014, %v1016
      %v1166 = vsel %vm1081, %v1018, %v1020
      %v1167 = vsel %vm1081, %v1020, %v1022
      %v1168 = vsel %vm1081, %v1022, %v1024
      %v1169 = vsel %vm1081, %v1026, %v1028
      %v1170 = vsel %vm1081, %v1028, %v1030
      %v1171 = vsel %vm1081, %v1030, %v1032
      %v1172 = vsel %vm1081, %v1034, %v1036
      %v1173 = vsel %vm1081, %v1036, %v1038
      %v1174 = vsel %vm1081, %v1038, %v1040
      %v1175 = vsel %vm1081, %v1042, %v1044
      %v1176 = vsel %vm1081, %v1044, %v1046
      %v1177 = vsel %vm1081, %v1046, %v1048
      %v1178 = vsel %vm1081, %v1050, %v1052
      %v1179 = vsel %vm1081, %v1052, %v1054
      %v1180 = vsel %vm1081, %v1054, %v1056
      %v1181 = vsel %vm1081, %v1058, %v1060
      %v1182 = vsel %vm1081, %v1060, %v1062
      %v1183 = vsel %vm1081, %v1062, %v1064
      %v1184 = vsel %vm1081, %v1066, %v1068
      %v1185 = vsel %vm1081, %v1068, %v1070
      %v1186 = vsel %vm1081, %v1070, %v1072
      %v1187 = vsel %vm1081, %v1074, %v1076
      %v1188 = vsel %vm1081, %v1076, %v1078
      %v1189 = vsel %vm1081, %v1078, %v1080
      %vm1298 = vcmask 523264
      %v1300 = vsel %vm1298, %v787, 0
      %v1303 = vsel %vm1298, %v792, 0
      %1305 = vmatpush.bf16.msra.mxu0 %v1103
      %1306 = vmatpush.bf16.msra.mxu0 %v1100
      %1307 = vmatpush.bf16.msra.mxu0 %v1097
      %1308 = vmatpush.bf16.msra.mxu0 %v1094
      %1309 = vmatpush.bf16.msra.mxu0 %v1091
      %1310 = vmatpush.bf16.msra.mxu0 %v1088
      %1311 = vmatpush.bf16.msra.mxu0 %v1085
      %1312 = vmatpush.bf16.msra.mxu0 %v1082
      %1313 = vmatmul.bf16.gmra.mxu0 %v783
      %v1314 = vpop.f32.mrf.mxu0
      %v1315 = vadd.f32 %v734, %v1314
      %v1316 = vpop.f32.mrf.mxu0
      %v1317 = vadd.f32 %v739, %v1316
      %1318 = vmatmul.bf16.gmra.mxu0 %v788
      %v1319 = vpop.f32.mrf.mxu0
      %v1320 = vadd.f32 %v744, %v1319
      %v1321 = vpop.f32.mrf.mxu0
      %v1322 = vadd.f32 %v749, %v1321
      %1323 = vdwg.mxu0
      %1324 = vmatpush.bf16.msra.mxu0 %v1127
      %1325 = vmatpush.bf16.msra.mxu0 %v1124
      %1326 = vmatpush.bf16.msra.mxu0 %v1121
      %1327 = vmatpush.bf16.msra.mxu0 %v1118
      %1328 = vmatpush.bf16.msra.mxu0 %v1115
      %1329 = vmatpush.bf16.msra.mxu0 %v1112
      %1330 = vmatpush.bf16.msra.mxu0 %v1109
      %1331 = vmatpush.bf16.msra.mxu0 %v1106
      %1332 = vmatmul.bf16.gmra.mxu0 %v784
      %v1333 = vpop.f32.mrf.mxu0
      %v1334 = vadd.f32 %v1315, %v1333
      %v1335 = vpop.f32.mrf.mxu0
      %v1336 = vadd.f32 %v1317, %v1335
      %1337 = vmatmul.bf16.gmra.mxu0 %v789
      %v1338 = vpop.f32.mrf.mxu0
      %v1339 = vadd.f32 %v1320, %v1338
      %v1340 = vpop.f32.mrf.mxu0
      %v1341 = vadd.f32 %v1322, %v1340
      %1342 = vdwg.mxu0
      %1343 = vmatpush.bf16.msra.mxu0 %v1151
      %1344 = vmatpush.bf16.msra.mxu0 %v1148
      %1345 = vmatpush.bf16.msra.mxu0 %v1145
      %1346 = vmatpush.bf16.msra.mxu0 %v1142
      %1347 = vmatpush.bf16.msra.mxu0 %v1139
      %1348 = vmatpush.bf16.msra.mxu0 %v1136
      %1349 = vmatpush.bf16.msra.mxu0 %v1133
      %1350 = vmatpush.bf16.msra.mxu0 %v1130
      %1351 = vmatmul.bf16.gmra.mxu0 %v785
      %v1352 = vpop.f32.mrf.mxu0
      %v1353 = vadd.f32 %v1334, %v1352
      %v1354 = vpop.f32.mrf.mxu0
      %v1355 = vadd.f32 %v1336, %v1354
      %1356 = vmatmul.bf16.gmra.mxu0 %v790
      %v1357 = vpop.f32.mrf.mxu0
      %v1358 = vadd.f32 %v1339, %v1357
      %v1359 = vpop.f32.mrf.mxu0
      %v1360 = vadd.f32 %v1341, %v1359
      %1361 = vdwg.mxu0
      %1362 = vmatpush.bf16.msra.mxu0 %v1175
      %1363 = vmatpush.bf16.msra.mxu0 %v1172
      %1364 = vmatpush.bf16.msra.mxu0 %v1169
      %1365 = vmatpush.bf16.msra.mxu0 %v1166
      %1366 = vmatpush.bf16.msra.mxu0 %v1163
      %1367 = vmatpush.bf16.msra.mxu0 %v1160
      %1368 = vmatpush.bf16.msra.mxu0 %v1157
      %1369 = vmatpush.bf16.msra.mxu0 %v1154
      %1370 = vmatmul.bf16.gmra.mxu0 %v786
      %v1371 = vpop.f32.mrf.mxu0
      %v1372 = vadd.f32 %v1353, %v1371
      %v1373 = vpop.f32.mrf.mxu0
      %v1374 = vadd.f32 %v1355, %v1373
      %1375 = vmatmul.bf16.gmra.mxu0 %v791
      %v1376 = vpop.f32.mrf.mxu0
      %v1377 = vadd.f32 %v1358, %v1376
      %v1378 = vpop.f32.mrf.mxu0
      %v1379 = vadd.f32 %v1360, %v1378
      %1380 = vdwg.mxu0
      %1381 = vmatpush.bf16.msra.mxu0 0
      %1382 = vmatpush.bf16.msra.mxu0 0
      %1383 = vmatpush.bf16.msra.mxu0 0
      %1384 = vmatpush.bf16.msra.mxu0 0
      %1385 = vmatpush.bf16.msra.mxu0 %v1187
      %1386 = vmatpush.bf16.msra.mxu0 %v1184
      %1387 = vmatpush.bf16.msra.mxu0 %v1181
      %1388 = vmatpush.bf16.msra.mxu0 %v1178
      %1389 = vmatmul.bf16.gmra.mxu0 %v1300
      %v1390 = vpop.f32.mrf.mxu0
      %v1391 = vadd.f32 %v1372, %v1390
      %v1392 = vpop.f32.mrf.mxu0
      %v1393 = vadd.f32 %v1374, %v1392
      %1394 = vmatmul.bf16.gmra.mxu0 %v1303
      %v1395 = vpop.f32.mrf.mxu0
      %v1396 = vadd.f32 %v1377, %v1395
      %v1397 = vpop.f32.mrf.mxu0
      %v1398 = vadd.f32 %v1379, %v1397
      %1399 = vdwg.mxu0
      %1400 = vmatpush.bf16.msra.mxu0 %v1104
      %1401 = vmatpush.bf16.msra.mxu0 %v1101
      %1402 = vmatpush.bf16.msra.mxu0 %v1098
      %1403 = vmatpush.bf16.msra.mxu0 %v1095
      %1404 = vmatpush.bf16.msra.mxu0 %v1092
      %1405 = vmatpush.bf16.msra.mxu0 %v1089
      %1406 = vmatpush.bf16.msra.mxu0 %v1086
      %1407 = vmatpush.bf16.msra.mxu0 %v1083
      %1408 = vmatmul.bf16.gmra.mxu0 %v783
      %v1409 = vpop.f32.mrf.mxu0
      %v1410 = vadd.f32 %v734, %v1409
      %v1411 = vpop.f32.mrf.mxu0
      %v1412 = vadd.f32 %v739, %v1411
      %1413 = vmatmul.bf16.gmra.mxu0 %v788
      %v1414 = vpop.f32.mrf.mxu0
      %v1415 = vadd.f32 %v744, %v1414
      %v1416 = vpop.f32.mrf.mxu0
      %v1417 = vadd.f32 %v749, %v1416
      %1418 = vdwg.mxu0
      %1419 = vmatpush.bf16.msra.mxu0 %v1128
      %1420 = vmatpush.bf16.msra.mxu0 %v1125
      %1421 = vmatpush.bf16.msra.mxu0 %v1122
      %1422 = vmatpush.bf16.msra.mxu0 %v1119
      %1423 = vmatpush.bf16.msra.mxu0 %v1116
      %1424 = vmatpush.bf16.msra.mxu0 %v1113
      %1425 = vmatpush.bf16.msra.mxu0 %v1110
      %1426 = vmatpush.bf16.msra.mxu0 %v1107
      %1427 = vmatmul.bf16.gmra.mxu0 %v784
      %v1428 = vpop.f32.mrf.mxu0
      %v1429 = vadd.f32 %v1410, %v1428
      %v1430 = vpop.f32.mrf.mxu0
      %v1431 = vadd.f32 %v1412, %v1430
      %1432 = vmatmul.bf16.gmra.mxu0 %v789
      %v1433 = vpop.f32.mrf.mxu0
      %v1434 = vadd.f32 %v1415, %v1433
      %v1435 = vpop.f32.mrf.mxu0
      %v1436 = vadd.f32 %v1417, %v1435
      %1437 = vdwg.mxu0
      %1438 = vmatpush.bf16.msra.mxu0 %v1152
      %1439 = vmatpush.bf16.msra.mxu0 %v1149
      %1440 = vmatpush.bf16.msra.mxu0 %v1146
      %1441 = vmatpush.bf16.msra.mxu0 %v1143
      %1442 = vmatpush.bf16.msra.mxu0 %v1140
      %1443 = vmatpush.bf16.msra.mxu0 %v1137
      %1444 = vmatpush.bf16.msra.mxu0 %v1134
      %1445 = vmatpush.bf16.msra.mxu0 %v1131
      %1446 = vmatmul.bf16.gmra.mxu0 %v785
      %v1447 = vpop.f32.mrf.mxu0
      %v1448 = vadd.f32 %v1429, %v1447
      %v1449 = vpop.f32.mrf.mxu0
      %v1450 = vadd.f32 %v1431, %v1449
      %1451 = vmatmul.bf16.gmra.mxu0 %v790
      %v1452 = vpop.f32.mrf.mxu0
      %v1453 = vadd.f32 %v1434, %v1452
      %v1454 = vpop.f32.mrf.mxu0
      %v1455 = vadd.f32 %v1436, %v1454
      %1456 = vdwg.mxu0
      %1457 = vmatpush.bf16.msra.mxu0 %v1176
      %1458 = vmatpush.bf16.msra.mxu0 %v1173
      %1459 = vmatpush.bf16.msra.mxu0 %v1170
      %1460 = vmatpush.bf16.msra.mxu0 %v1167
      %1461 = vmatpush.bf16.msra.mxu0 %v1164
      %1462 = vmatpush.bf16.msra.mxu0 %v1161
      %1463 = vmatpush.bf16.msra.mxu0 %v1158
      %1464 = vmatpush.bf16.msra.mxu0 %v1155
      %1465 = vmatmul.bf16.gmra.mxu0 %v786
      %v1466 = vpop.f32.mrf.mxu0
      %v1467 = vadd.f32 %v1448, %v1466
      %v1468 = vpop.f32.mrf.mxu0
      %v1469 = vadd.f32 %v1450, %v1468
      %1470 = vmatmul.bf16.gmra.mxu0 %v791
      %v1471 = vpop.f32.mrf.mxu0
      %v1472 = vadd.f32 %v1453, %v1471
      %v1473 = vpop.f32.mrf.mxu0
      %v1474 = vadd.f32 %v1455, %v1473
      %1475 = vdwg.mxu0
      %1476 = vmatpush.bf16.msra.mxu0 0
      %1477 = vmatpush.bf16.msra.mxu0 0
      %1478 = vmatpush.bf16.msra.mxu0 0
      %1479 = vmatpush.bf16.msra.mxu0 0
      %1480 = vmatpush.bf16.msra.mxu0 %v1188
      %1481 = vmatpush.bf16.msra.mxu0 %v1185
      %1482 = vmatpush.bf16.msra.mxu0 %v1182
      %1483 = vmatpush.bf16.msra.mxu0 %v1179
      %1484 = vmatmul.bf16.gmra.mxu0 %v1300
      %v1485 = vpop.f32.mrf.mxu0
      %v1486 = vadd.f32 %v1467, %v1485
      %v1487 = vpop.f32.mrf.mxu0
      %v1488 = vadd.f32 %v1469, %v1487
      %1489 = vmatmul.bf16.gmra.mxu0 %v1303
      %v1490 = vpop.f32.mrf.mxu0
      %v1491 = vadd.f32 %v1472, %v1490
      %v1492 = vpop.f32.mrf.mxu0
      %v1493 = vadd.f32 %v1474, %v1492
      %1494 = vdwg.mxu0
      %1495 = vmatpush.bf16.msra.mxu0 %v1105
      %1496 = vmatpush.bf16.msra.mxu0 %v1102
      %1497 = vmatpush.bf16.msra.mxu0 %v1099
      %1498 = vmatpush.bf16.msra.mxu0 %v1096
      %1499 = vmatpush.bf16.msra.mxu0 %v1093
      %1500 = vmatpush.bf16.msra.mxu0 %v1090
      %1501 = vmatpush.bf16.msra.mxu0 %v1087
      %1502 = vmatpush.bf16.msra.mxu0 %v1084
      %1503 = vmatmul.bf16.gmra.mxu0 %v783
      %v1504 = vpop.f32.mrf.mxu0
      %v1505 = vadd.f32 %v734, %v1504
      %v1506 = vpop.f32.mrf.mxu0
      %v1507 = vadd.f32 %v739, %v1506
      %1508 = vmatmul.bf16.gmra.mxu0 %v788
      %v1509 = vpop.f32.mrf.mxu0
      %v1510 = vadd.f32 %v744, %v1509
      %v1511 = vpop.f32.mrf.mxu0
      %v1512 = vadd.f32 %v749, %v1511
      %1513 = vdwg.mxu0
      %1514 = vmatpush.bf16.msra.mxu0 %v1129
      %1515 = vmatpush.bf16.msra.mxu0 %v1126
      %1516 = vmatpush.bf16.msra.mxu0 %v1123
      %1517 = vmatpush.bf16.msra.mxu0 %v1120
      %1518 = vmatpush.bf16.msra.mxu0 %v1117
      %1519 = vmatpush.bf16.msra.mxu0 %v1114
      %1520 = vmatpush.bf16.msra.mxu0 %v1111
      %1521 = vmatpush.bf16.msra.mxu0 %v1108
      %1522 = vmatmul.bf16.gmra.mxu0 %v784
      %v1523 = vpop.f32.mrf.mxu0
      %v1524 = vadd.f32 %v1505, %v1523
      %v1525 = vpop.f32.mrf.mxu0
      %v1526 = vadd.f32 %v1507, %v1525
      %1527 = vmatmul.bf16.gmra.mxu0 %v789
      %v1528 = vpop.f32.mrf.mxu0
      %v1529 = vadd.f32 %v1510, %v1528
      %v1530 = vpop.f32.mrf.mxu0
      %v1531 = vadd.f32 %v1512, %v1530
      %1532 = vdwg.mxu0
      %1533 = vmatpush.bf16.msra.mxu0 %v1153
      %1534 = vmatpush.bf16.msra.mxu0 %v1150
      %1535 = vmatpush.bf16.msra.mxu0 %v1147
      %1536 = vmatpush.bf16.msra.mxu0 %v1144
      %1537 = vmatpush.bf16.msra.mxu0 %v1141
      %1538 = vmatpush.bf16.msra.mxu0 %v1138
      %1539 = vmatpush.bf16.msra.mxu0 %v1135
      %1540 = vmatpush.bf16.msra.mxu0 %v1132
      %1541 = vmatmul.bf16.gmra.mxu0 %v785
      %v1542 = vpop.f32.mrf.mxu0
      %v1543 = vadd.f32 %v1524, %v1542
      %v1544 = vpop.f32.mrf.mxu0
      %v1545 = vadd.f32 %v1526, %v1544
      %1546 = vmatmul.bf16.gmra.mxu0 %v790
      %v1547 = vpop.f32.mrf.mxu0
      %v1548 = vadd.f32 %v1529, %v1547
      %v1549 = vpop.f32.mrf.mxu0
      %v1550 = vadd.f32 %v1531, %v1549
      %1551 = vdwg.mxu0
      %1552 = vmatpush.bf16.msra.mxu0 %v1177
      %1553 = vmatpush.bf16.msra.mxu0 %v1174
      %1554 = vmatpush.bf16.msra.mxu0 %v1171
      %1555 = vmatpush.bf16.msra.mxu0 %v1168
      %1556 = vmatpush.bf16.msra.mxu0 %v1165
      %1557 = vmatpush.bf16.msra.mxu0 %v1162
      %1558 = vmatpush.bf16.msra.mxu0 %v1159
      %1559 = vmatpush.bf16.msra.mxu0 %v1156
      %1560 = vmatmul.bf16.gmra.mxu0 %v786
      %v1561 = vpop.f32.mrf.mxu0
      %v1562 = vadd.f32 %v1543, %v1561
      %v1563 = vpop.f32.mrf.mxu0
      %v1564 = vadd.f32 %v1545, %v1563
      %1565 = vmatmul.bf16.gmra.mxu0 %v791
      %v1566 = vpop.f32.mrf.mxu0
      %v1567 = vadd.f32 %v1548, %v1566
      %v1568 = vpop.f32.mrf.mxu0
      %v1569 = vadd.f32 %v1550, %v1568
      %1570 = vdwg.mxu0
      %1571 = vmatpush.bf16.msra.mxu0 0
      %1572 = vmatpush.bf16.msra.mxu0 0
      %1573 = vmatpush.bf16.msra.mxu0 0
      %1574 = vmatpush.bf16.msra.mxu0 0
      %1575 = vmatpush.bf16.msra.mxu0 %v1189
      %1576 = vmatpush.bf16.msra.mxu0 %v1186
      %1577 = vmatpush.bf16.msra.mxu0 %v1183
      %1578 = vmatpush.bf16.msra.mxu0 %v1180
      %1579 = vmatmul.bf16.gmra.mxu0 %v1300
      %v1580 = vpop.f32.mrf.mxu0
      %v1581 = vadd.f32 %v1562, %v1580
      %v1582 = vpop.f32.mrf.mxu0
      %v1583 = vadd.f32 %v1564, %v1582
      %1584 = vmatmul.bf16.gmra.mxu0 %v1303
      %v1585 = vpop.f32.mrf.mxu0
      %v1586 = vadd.f32 %v1567, %v1585
      %v1587 = vpop.f32.mrf.mxu0
      %v1588 = vadd.f32 %v1569, %v1587
      %1589 = vdwg.mxu0
      %v1590 = vmax.f32 %v1391, 0.0
      %v1591 = vmax.f32 %v1486, 0.0
      %v1592 = vmax.f32 %v1581, 0.0
      %v1593 = vmax.f32 %v1393, 0.0
      %v1594 = vmax.f32 %v1488, 0.0
      %v1595 = vmax.f32 %v1583, 0.0
      %v1596 = vmax.f32 %v1396, 0.0
      %v1597 = vmax.f32 %v1491, 0.0
      %v1598 = vmax.f32 %v1586, 0.0
      %v1599 = vmax.f32 %v1398, 0.0
      %v1600 = vmax.f32 %v1493, 0.0
      %v1601 = vmax.f32 %v1588, 0.0
      %v1603 = vperm.slane %v354, 0
      %v1604 = vperm.slane %v354, 1
      %v1605 = vperm.slane %v354, 2
      %v1609 = vmul.f32 %v1590, %v1603
      %v1610 = vmul.f32 %v1591, %v1604
      %v1611 = vmul.f32 %v1592, %v1605
      %v1612 = vmul.f32 %v1593, %v1603
      %v1613 = vmul.f32 %v1594, %v1604
      %v1614 = vmul.f32 %v1595, %v1605
      %v1615 = vmul.f32 %v1596, %v1603
      %v1616 = vmul.f32 %v1597, %v1604
      %v1617 = vmul.f32 %v1598, %v1605
      %v1618 = vmul.f32 %v1599, %v1603
      %v1619 = vmul.f32 %v1600, %v1604
      %v1620 = vmul.f32 %v1601, %v1605
      %v1621 = vpack.c.bf16 %v1610, %v1609
      %v1622 = vpack.c.bf16 %v1611, %v1611
      %v1623 = vpack.c.bf16 %v1613, %v1612
      %v1624 = vpack.c.bf16 %v1614, %v1614
      %v1625 = vpack.c.bf16 %v1616, %v1615
      %v1626 = vpack.c.bf16 %v1617, %v1617
      %v1627 = vpack.c.bf16 %v1619, %v1618
      %v1628 = vpack.c.bf16 %v1620, %v1620
      %v1637 = vunpack.c.l.b16 %v1621
      %v1638 = vunpack.c.h.b16 %v1621
      %v1639 = vunpack.c.l.b16 %v1622
      %v1640 = vunpack.c.l.b16 %v1623
      %v1641 = vunpack.c.h.b16 %v1623
      %v1642 = vunpack.c.l.b16 %v1624
      %v1643 = vunpack.c.l.b16 %v1625
      %v1644 = vunpack.c.h.b16 %v1625
      %v1645 = vunpack.c.l.b16 %v1626
      %v1646 = vunpack.c.l.b16 %v1627
      %v1647 = vunpack.c.h.b16 %v1627
      %v1648 = vunpack.c.l.b16 %v1628
      %v1649 = vpack.c.b16 %v1640, %v1637
      %v1650 = vpack.c.b16 %v1641, %v1638
      %v1651 = vpack.c.b16 %v1642, %v1639
      %v1652 = vpack.c.b16 %v1646, %v1643
      %v1653 = vpack.c.b16 %v1647, %v1644
      %v1654 = vpack.c.b16 %v1648, %v1645
      %1655 = vrot.lane.b32.xlu0 %v1651, 127
      %v1656 = vpop.permute.xlu0 %1655
      %1657 = vrot.lane.b32.xlu0 %v1649, 127
      %v1658 = vpop.permute.xlu0 %1657
      %1659 = vrot.lane.b32.xlu0 %v1650, 127
      %v1660 = vpop.permute.xlu0 %1659
      %1661 = vrot.lane.b32.xlu0 %v1654, 127
      %v1662 = vpop.permute.xlu0 %1661
      %1663 = vrot.lane.b32.xlu0 %v1652, 127
      %v1664 = vpop.permute.xlu0 %1663
      %1665 = vrot.lane.b32.xlu0 %v1653, 127
      %v1666 = vpop.permute.xlu0 %1665
      %v1667 = vsel %vm447, %v1656, %v1658
      %v1668 = vsel %vm447, %v1658, %v1660
      %v1669 = vsel %vm447, %v1660, %v1656
      %v1670 = vsel %vm447, %v1662, %v1664
      %v1671 = vsel %vm447, %v1664, %v1666
      %v1672 = vsel %vm447, %v1666, %v1662
      %1673 = vrot.lane.b32.xlu0 %v1651, 126
      %v1674 = vpop.permute.xlu0 %1673
      %1675 = vrot.lane.b32.xlu0 %v1649, 126
      %v1676 = vpop.permute.xlu0 %1675
      %1677 = vrot.lane.b32.xlu0 %v1650, 126
      %v1678 = vpop.permute.xlu0 %1677
      %1679 = vrot.lane.b32.xlu0 %v1654, 126
      %v1680 = vpop.permute.xlu0 %1679
      %1681 = vrot.lane.b32.xlu0 %v1652, 126
      %v1682 = vpop.permute.xlu0 %1681
      %1683 = vrot.lane.b32.xlu0 %v1653, 126
      %v1684 = vpop.permute.xlu0 %1683
      %v1685 = vsel %vm484, %v1674, %v1676
      %v1686 = vsel %vm484, %v1676, %v1678
      %v1687 = vsel %vm484, %v1678, %v1674
      %v1688 = vsel %vm484, %v1680, %v1682
      %v1689 = vsel %vm484, %v1682, %v1684
      %v1690 = vsel %vm484, %v1684, %v1680
      %1691 = vrot.lane.b32.xlu0 %v1651, 110
      %v1692 = vpop.permute.xlu0 %1691
      %1693 = vrot.lane.b32.xlu0 %v1649, 110
      %v1694 = vpop.permute.xlu0 %1693
      %1695 = vrot.lane.b32.xlu0 %v1650, 110
      %v1696 = vpop.permute.xlu0 %1695
      %1697 = vrot.lane.b32.xlu0 %v1654, 110
      %v1698 = vpop.permute.xlu0 %1697
      %1699 = vrot.lane.b32.xlu0 %v1652, 110
      %v1700 = vpop.permute.xlu0 %1699
      %1701 = vrot.lane.b32.xlu0 %v1653, 110
      %v1702 = vpop.permute.xlu0 %1701
      %v1703 = vsel %vm521, %v1692, %v1694
      %v1704 = vsel %vm521, %v1694, %v1696
      %v1705 = vsel %vm521, %v1696, %v1692
      %v1706 = vsel %vm521, %v1698, %v1700
      %v1707 = vsel %vm521, %v1700, %v1702
      %v1708 = vsel %vm521, %v1702, %v1698
      %1709 = vrot.lane.b32.xlu0 %v1649, 109
      %v1710 = vpop.permute.xlu0 %1709
      %1711 = vrot.lane.b32.xlu0 %v1650, 109
      %v1712 = vpop.permute.xlu0 %1711
      %1713 = vrot.lane.b32.xlu0 %v1651, 109
      %v1714 = vpop.permute.xlu0 %1713
      %1715 = vrot.lane.b32.xlu0 %v1652, 109
      %v1716 = vpop.permute.xlu0 %1715
      %1717 = vrot.lane.b32.xlu0 %v1653, 109
      %v1718 = vpop.permute.xlu0 %1717
      %1719 = vrot.lane.b32.xlu0 %v1654, 109
      %v1720 = vpop.permute.xlu0 %1719
      %v1721 = vsel %vm558, %v1710, %v1712
      %v1722 = vsel %vm558, %v1712, %v1714
      %v1723 = vsel %vm558, %v1716, %v1718
      %v1724 = vsel %vm558, %v1718, %v1720
      %1725 = vrot.lane.b32.xlu0 %v1649, 108
      %v1726 = vpop.permute.xlu0 %1725
      %1727 = vrot.lane.b32.xlu0 %v1650, 108
      %v1728 = vpop.permute.xlu0 %1727
      %1729 = vrot.lane.b32.xlu0 %v1651, 108
      %v1730 = vpop.permute.xlu0 %1729
      %1731 = vrot.lane.b32.xlu0 %v1652, 108
      %v1732 = vpop.permute.xlu0 %1731
      %1733 = vrot.lane.b32.xlu0 %v1653, 108
      %v1734 = vpop.permute.xlu0 %1733
      %1735 = vrot.lane.b32.xlu0 %v1654, 108
      %v1736 = vpop.permute.xlu0 %1735
      %v1737 = vsel %vm591, %v1726, %v1728
      %v1738 = vsel %vm591, %v1728, %v1730
      %v1739 = vsel %vm591, %v1730, %v1726
      %v1740 = vsel %vm591, %v1732, %v1734
      %v1741 = vsel %vm591, %v1734, %v1736
      %v1742 = vsel %vm591, %v1736, %v1732
      %1743 = vrot.lane.b32.xlu0 %v1649, 92
      %v1744 = vpop.permute.xlu0 %1743
      %1745 = vrot.lane.b32.xlu0 %v1650, 92
      %v1746 = vpop.permute.xlu0 %1745
      %1747 = vrot.lane.b32.xlu0 %v1651, 92
      %v1748 = vpop.permute.xlu0 %1747
      %1749 = vrot.lane.b32.xlu0 %v1652, 92
      %v1750 = vpop.permute.xlu0 %1749
      %1751 = vrot.lane.b32.xlu0 %v1653, 92
      %v1752 = vpop.permute.xlu0 %1751
      %1753 = vrot.lane.b32.xlu0 %v1654, 92
      %v1754 = vpop.permute.xlu0 %1753
      %v1755 = vsel %vm628, %v1744, %v1746
      %v1756 = vsel %vm628, %v1746, %v1748
      %v1757 = vsel %vm628, %v1748, %v1744
      %v1758 = vsel %vm628, %v1750, %v1752
      %v1759 = vsel %vm628, %v1752, %v1754
      %v1760 = vsel %vm628, %v1754, %v1750
      %1761 = vrot.lane.b32.xlu0 %v1649, 91
      %v1762 = vpop.permute.xlu0 %1761
      %1763 = vrot.lane.b32.xlu0 %v1650, 91
      %v1764 = vpop.permute.xlu0 %1763
      %1765 = vrot.lane.b32.xlu0 %v1651, 91
      %v1766 = vpop.permute.xlu0 %1765
      %1767 = vrot.lane.b32.xlu0 %v1652, 91
      %v1768 = vpop.permute.xlu0 %1767
      %1769 = vrot.lane.b32.xlu0 %v1653, 91
      %v1770 = vpop.permute.xlu0 %1769
      %1771 = vrot.lane.b32.xlu0 %v1654, 91
      %v1772 = vpop.permute.xlu0 %1771
      %v1773 = vsel %vm665, %v1762, %v1764
      %v1774 = vsel %vm665, %v1764, %v1766
      %v1775 = vsel %vm665, %v1766, %v1762
      %v1776 = vsel %vm665, %v1768, %v1770
      %v1777 = vsel %vm665, %v1770, %v1772
      %v1778 = vsel %vm665, %v1772, %v1768
      %1779 = vrot.lane.b32.xlu0 %v1649, 90
      %v1780 = vpop.permute.xlu0 %1779
      %1781 = vrot.lane.b32.xlu0 %v1650, 90
      %v1782 = vpop.permute.xlu0 %1781
      %1783 = vrot.lane.b32.xlu0 %v1651, 90
      %v1784 = vpop.permute.xlu0 %1783
      %1785 = vrot.lane.b32.xlu0 %v1652, 90
      %v1786 = vpop.permute.xlu0 %1785
      %1787 = vrot.lane.b32.xlu0 %v1653, 90
      %v1788 = vpop.permute.xlu0 %1787
      %1789 = vrot.lane.b32.xlu0 %v1654, 90
      %v1790 = vpop.permute.xlu0 %1789
      %v1791 = vsel %vm702, %v1780, %v1782
      %v1792 = vsel %vm702, %v1782, %v1784
      %v1793 = vsel %vm702, %v1784, %v1780
      %v1794 = vsel %vm702, %v1786, %v1788
      %v1795 = vsel %vm702, %v1788, %v1790
      %v1796 = vsel %vm702, %v1790, %v1786
      %v1797 = vld [vmem:[%s3] sm:$0xff]
      %v1798 = vld [vmem:[%s3 + $0x8] sm:$0xf]
      %v1799 = vld [vmem:[%s3 + $0xc] sm:$0xff]
      %v1800 = vld [vmem:[%s3 + $0x14] sm:$0xf]
      %v1801 = vld [vmem:[%s6] sm:$0xff]
      %v1802 = vld [vmem:[%s6 + $0x8] sm:$0xff]
      %1804 = vset.pattern.permute.xlu0 0
      %1805 = vperm.xlu0 %1804, %v1801
      %v1806 = vpop.permute.xlu0 %1805
      %1809 = vset.pattern.permute.xlu0 0
      %1810 = vperm.xlu0 %1809, %v1802
      %v1811 = vpop.permute.xlu0 %1810
      %v1817 = vunpack.c.l.b16 %v1797
      %v1818 = vunpack.c.h.b16 %v1797
      %v1819 = vunpack.c.l.b16 %v1798
      %v1820 = vunpack.c.l.b16 %v1799
      %v1821 = vunpack.c.h.b16 %v1799
      %v1822 = vunpack.c.l.b16 %v1800
      %v1823 = vpack.c.b16 %v1820, %v1817
      %v1824 = vpack.c.b16 %v1821, %v1818
      %v1825 = vpack.c.b16 %v1822, %v1819
      %1828 = vrot.lane.b32.xlu0 %v1651, 19
      %v1829 = vpop.permute.xlu0 %1828
      %1830 = vrot.lane.b32.xlu0 %v1649, 19
      %v1831 = vpop.permute.xlu0 %1830
      %1832 = vrot.lane.b32.xlu0 %v1650, 19
      %v1833 = vpop.permute.xlu0 %1832
      %1834 = vrot.lane.b32.xlu0 %v1654, 19
      %v1835 = vpop.permute.xlu0 %1834
      %1836 = vrot.lane.b32.xlu0 %v1652, 19
      %v1837 = vpop.permute.xlu0 %1836
      %1838 = vrot.lane.b32.xlu0 %v1653, 19
      %v1839 = vpop.permute.xlu0 %1838
      %1840 = vrot.lane.b32.xlu0 %v1667, 19
      %v1841 = vpop.permute.xlu0 %1840
      %1842 = vrot.lane.b32.xlu0 %v1668, 19
      %v1843 = vpop.permute.xlu0 %1842
      %1844 = vrot.lane.b32.xlu0 %v1669, 19
      %v1845 = vpop.permute.xlu0 %1844
      %1846 = vrot.lane.b32.xlu0 %v1656, 19
      %v1847 = vpop.permute.xlu0 %1846
      %1848 = vrot.lane.b32.xlu0 %v1670, 19
      %v1849 = vpop.permute.xlu0 %1848
      %1850 = vrot.lane.b32.xlu0 %v1671, 19
      %v1851 = vpop.permute.xlu0 %1850
      %1852 = vrot.lane.b32.xlu0 %v1672, 19
      %v1853 = vpop.permute.xlu0 %1852
      %1854 = vrot.lane.b32.xlu0 %v1662, 19
      %v1855 = vpop.permute.xlu0 %1854
      %1856 = vrot.lane.b32.xlu0 %v1685, 19
      %v1857 = vpop.permute.xlu0 %1856
      %1858 = vrot.lane.b32.xlu0 %v1686, 19
      %v1859 = vpop.permute.xlu0 %1858
      %1860 = vrot.lane.b32.xlu0 %v1687, 19
      %v1861 = vpop.permute.xlu0 %1860
      %1862 = vrot.lane.b32.xlu0 %v1674, 19
      %v1863 = vpop.permute.xlu0 %1862
      %1864 = vrot.lane.b32.xlu0 %v1688, 19
      %v1865 = vpop.permute.xlu0 %1864
      %1866 = vrot.lane.b32.xlu0 %v1689, 19
      %v1867 = vpop.permute.xlu0 %1866
      %1868 = vrot.lane.b32.xlu0 %v1690, 19
      %v1869 = vpop.permute.xlu0 %1868
      %1870 = vrot.lane.b32.xlu0 %v1680, 19
      %v1871 = vpop.permute.xlu0 %1870
      %1872 = vrot.lane.b32.xlu0 %v1703, 19
      %v1873 = vpop.permute.xlu0 %1872
      %1874 = vrot.lane.b32.xlu0 %v1704, 19
      %v1875 = vpop.permute.xlu0 %1874
      %1876 = vrot.lane.b32.xlu0 %v1705, 19
      %v1877 = vpop.permute.xlu0 %1876
      %1878 = vrot.lane.b32.xlu0 %v1692, 19
      %v1879 = vpop.permute.xlu0 %1878
      %1880 = vrot.lane.b32.xlu0 %v1706, 19
      %v1881 = vpop.permute.xlu0 %1880
      %1882 = vrot.lane.b32.xlu0 %v1707, 19
      %v1883 = vpop.permute.xlu0 %1882
      %1884 = vrot.lane.b32.xlu0 %v1708, 19
      %v1885 = vpop.permute.xlu0 %1884
      %1886 = vrot.lane.b32.xlu0 %v1698, 19
      %v1887 = vpop.permute.xlu0 %1886
      %1888 = vrot.lane.b32.xlu0 %v1710, 19
      %v1889 = vpop.permute.xlu0 %1888
      %1890 = vrot.lane.b32.xlu0 %v1721, 19
      %v1891 = vpop.permute.xlu0 %1890
      %1892 = vrot.lane.b32.xlu0 %v1722, 19
      %v1893 = vpop.permute.xlu0 %1892
      %1894 = vrot.lane.b32.xlu0 %v1714, 19
      %v1895 = vpop.permute.xlu0 %1894
      %1896 = vrot.lane.b32.xlu0 %v1716, 19
      %v1897 = vpop.permute.xlu0 %1896
      %1898 = vrot.lane.b32.xlu0 %v1723, 19
      %v1899 = vpop.permute.xlu0 %1898
      %1900 = vrot.lane.b32.xlu0 %v1724, 19
      %v1901 = vpop.permute.xlu0 %1900
      %1902 = vrot.lane.b32.xlu0 %v1720, 19
      %v1903 = vpop.permute.xlu0 %1902
      %1904 = vrot.lane.b32.xlu0 %v1726, 19
      %v1905 = vpop.permute.xlu0 %1904
      %1906 = vrot.lane.b32.xlu0 %v1737, 19
      %v1907 = vpop.permute.xlu0 %1906
      %1908 = vrot.lane.b32.xlu0 %v1738, 19
      %v1909 = vpop.permute.xlu0 %1908
      %1910 = vrot.lane.b32.xlu0 %v1739, 19
      %v1911 = vpop.permute.xlu0 %1910
      %1912 = vrot.lane.b32.xlu0 %v1732, 19
      %v1913 = vpop.permute.xlu0 %1912
      %1914 = vrot.lane.b32.xlu0 %v1740, 19
      %v1915 = vpop.permute.xlu0 %1914
      %1916 = vrot.lane.b32.xlu0 %v1741, 19
      %v1917 = vpop.permute.xlu0 %1916
      %1918 = vrot.lane.b32.xlu0 %v1742, 19
      %v1919 = vpop.permute.xlu0 %1918
      %1920 = vrot.lane.b32.xlu0 %v1744, 19
      %v1921 = vpop.permute.xlu0 %1920
      %1922 = vrot.lane.b32.xlu0 %v1755, 19
      %v1923 = vpop.permute.xlu0 %1922
      %1924 = vrot.lane.b32.xlu0 %v1756, 19
      %v1925 = vpop.permute.xlu0 %1924
      %1926 = vrot.lane.b32.xlu0 %v1757, 19
      %v1927 = vpop.permute.xlu0 %1926
      %1928 = vrot.lane.b32.xlu0 %v1750, 19
      %v1929 = vpop.permute.xlu0 %1928
      %1930 = vrot.lane.b32.xlu0 %v1758, 19
      %v1931 = vpop.permute.xlu0 %1930
      %1932 = vrot.lane.b32.xlu0 %v1759, 19
      %v1933 = vpop.permute.xlu0 %1932
      %1934 = vrot.lane.b32.xlu0 %v1760, 19
      %v1935 = vpop.permute.xlu0 %1934
      %1936 = vrot.lane.b32.xlu0 %v1762, 19
      %v1937 = vpop.permute.xlu0 %1936
      %1938 = vrot.lane.b32.xlu0 %v1773, 19
      %v1939 = vpop.permute.xlu0 %1938
      %1940 = vrot.lane.b32.xlu0 %v1774, 19
      %v1941 = vpop.permute.xlu0 %1940
      %1942 = vrot.lane.b32.xlu0 %v1775, 19
      %v1943 = vpop.permute.xlu0 %1942
      %1944 = vrot.lane.b32.xlu0 %v1768, 19
      %v1945 = vpop.permute.xlu0 %1944
      %1946 = vrot.lane.b32.xlu0 %v1776, 19
      %v1947 = vpop.permute.xlu0 %1946
      %1948 = vrot.lane.b32.xlu0 %v1777, 19
      %v1949 = vpop.permute.xlu0 %1948
      %1950 = vrot.lane.b32.xlu0 %v1778, 19
      %v1951 = vpop.permute.xlu0 %1950
      %1952 = vrot.lane.b32.xlu0 %v1780, 19
      %v1953 = vpop.permute.xlu0 %1952
      %1954 = vrot.lane.b32.xlu0 %v1791, 19
      %v1955 = vpop.permute.xlu0 %1954
      %1956 = vrot.lane.b32.xlu0 %v1792, 19
      %v1957 = vpop.permute.xlu0 %1956
      %1958 = vrot.lane.b32.xlu0 %v1793, 19
      %v1959 = vpop.permute.xlu0 %1958
      %1960 = vrot.lane.b32.xlu0 %v1786, 19
      %v1961 = vpop.permute.xlu0 %1960
      %1962 = vrot.lane.b32.xlu0 %v1794, 19
      %v1963 = vpop.permute.xlu0 %1962
      %1964 = vrot.lane.b32.xlu0 %v1795, 19
      %v1965 = vpop.permute.xlu0 %1964
      %1966 = vrot.lane.b32.xlu0 %v1796, 19
      %v1967 = vpop.permute.xlu0 %1966
      %v1968 = vsel %vm1081, %v1829, %v1831
      %v1969 = vsel %vm1081, %v1831, %v1833
      %v1970 = vsel %vm1081, %v1833, %v1829
      %v1971 = vsel %vm1081, %v1835, %v1837
      %v1972 = vsel %vm1081, %v1837, %v1839
      %v1973 = vsel %vm1081, %v1839, %v1835
      %v1974 = vsel %vm1081, %v1841, %v1843
      %v1975 = vsel %vm1081, %v1843, %v1845
      %v1976 = vsel %vm1081, %v1845, %v1847
      %v1977 = vsel %vm1081, %v1849, %v1851
      %v1978 = vsel %vm1081, %v1851, %v1853
      %v1979 = vsel %vm1081, %v1853, %v1855
      %v1980 = vsel %vm1081, %v1857, %v1859
      %v1981 = vsel %vm1081, %v1859, %v1861
      %v1982 = vsel %vm1081, %v1861, %v1863
      %v1983 = vsel %vm1081, %v1865, %v1867
      %v1984 = vsel %vm1081, %v1867, %v1869
      %v1985 = vsel %vm1081, %v1869, %v1871
      %v1986 = vsel %vm1081, %v1873, %v1875
      %v1987 = vsel %vm1081, %v1875, %v1877
      %v1988 = vsel %vm1081, %v1877, %v1879
      %v1989 = vsel %vm1081, %v1881, %v1883
      %v1990 = vsel %vm1081, %v1883, %v1885
      %v1991 = vsel %vm1081, %v1885, %v1887
      %v1992 = vsel %vm1081, %v1889, %v1891
      %v1993 = vsel %vm1081, %v1891, %v1893
      %v1994 = vsel %vm1081, %v1893, %v1895
      %v1995 = vsel %vm1081, %v1897, %v1899
      %v1996 = vsel %vm1081, %v1899, %v1901
      %v1997 = vsel %vm1081, %v1901, %v1903
      %v1998 = vsel %vm1081, %v1905, %v1907
      %v1999 = vsel %vm1081, %v1907, %v1909
      %v2000 = vsel %vm1081, %v1909, %v1911
      %v2001 = vsel %vm1081, %v1913, %v1915
      %v2002 = vsel %vm1081, %v1915, %v1917
      %v2003 = vsel %vm1081, %v1917, %v1919
      %v2004 = vsel %vm1081, %v1921, %v1923
      %v2005 = vsel %vm1081, %v1923, %v1925
      %v2006 = vsel %vm1081, %v1925, %v1927
      %v2007 = vsel %vm1081, %v1929, %v1931
      %v2008 = vsel %vm1081, %v1931, %v1933
      %v2009 = vsel %vm1081, %v1933, %v1935
      %v2010 = vsel %vm1081, %v1937, %v1939
      %v2011 = vsel %vm1081, %v1939, %v1941
      %v2012 = vsel %vm1081, %v1941, %v1943
      %v2013 = vsel %vm1081, %v1945, %v1947
      %v2014 = vsel %vm1081, %v1947, %v1949
      %v2015 = vsel %vm1081, %v1949, %v1951
      %v2016 = vsel %vm1081, %v1953, %v1955
      %v2017 = vsel %vm1081, %v1955, %v1957
      %v2018 = vsel %vm1081, %v1957, %v1959
      %v2019 = vsel %vm1081, %v1961, %v1963
      %v2020 = vsel %vm1081, %v1963, %v1965
      %v2021 = vsel %vm1081, %v1965, %v1967
      %vm2076 = vcmask 261120
      %v2078 = vsel %vm2076, %v1825, 0
      %2080 = vmatpush.bf16.msra.mxu0 %v1989
      %2081 = vmatpush.bf16.msra.mxu0 %v1986
      %2082 = vmatpush.bf16.msra.mxu0 %v1983
      %2083 = vmatpush.bf16.msra.mxu0 %v1980
      %2084 = vmatpush.bf16.msra.mxu0 %v1977
      %2085 = vmatpush.bf16.msra.mxu0 %v1974
      %2086 = vmatpush.bf16.msra.mxu0 %v1971
      %2087 = vmatpush.bf16.msra.mxu0 %v1968
      %2088 = vmatmul.bf16.gmra.mxu0 %v1823
      %v2089 = vpop.f32.mrf.mxu0
      %v2090 = vadd.f32 %v1806, %v2089
      %v2091 = vpop.f32.mrf.mxu0
      %v2092 = vadd.f32 %v1811, %v2091
      %2093 = vdwg.mxu0
      %2094 = vmatpush.bf16.msra.mxu0 %v2013
      %2095 = vmatpush.bf16.msra.mxu0 %v2010
      %2096 = vmatpush.bf16.msra.mxu0 %v2007
      %2097 = vmatpush.bf16.msra.mxu0 %v2004
      %2098 = vmatpush.bf16.msra.mxu0 %v2001
      %2099 = vmatpush.bf16.msra.mxu0 %v1998
      %2100 = vmatpush.bf16.msra.mxu0 %v1995
      %2101 = vmatpush.bf16.msra.mxu0 %v1992
      %2102 = vmatmul.bf16.gmra.mxu0 %v1824
      %v2103 = vpop.f32.mrf.mxu0
      %v2104 = vadd.f32 %v2090, %v2103
      %v2105 = vpop.f32.mrf.mxu0
      %v2106 = vadd.f32 %v2092, %v2105
      %2107 = vdwg.mxu0
      %2108 = vmatpush.bf16.msra.mxu0 0
      %2109 = vmatpush.bf16.msra.mxu0 0
      %2110 = vmatpush.bf16.msra.mxu0 0
      %2111 = vmatpush.bf16.msra.mxu0 0
      %2112 = vmatpush.bf16.msra.mxu0 0
      %2113 = vmatpush.bf16.msra.mxu0 0
      %2114 = vmatpush.bf16.msra.mxu0 %v2019
      %2115 = vmatpush.bf16.msra.mxu0 %v2016
      %2116 = vmatmul.bf16.gmra.mxu0 %v2078
      %v2117 = vpop.f32.mrf.mxu0
      %v2118 = vadd.f32 %v2104, %v2117
      %v2119 = vpop.f32.mrf.mxu0
      %v2120 = vadd.f32 %v2106, %v2119
      %2121 = vdwg.mxu0
      %2122 = vmatpush.bf16.msra.mxu0 %v1990
      %2123 = vmatpush.bf16.msra.mxu0 %v1987
      %2124 = vmatpush.bf16.msra.mxu0 %v1984
      %2125 = vmatpush.bf16.msra.mxu0 %v1981
      %2126 = vmatpush.bf16.msra.mxu0 %v1978
      %2127 = vmatpush.bf16.msra.mxu0 %v1975
      %2128 = vmatpush.bf16.msra.mxu0 %v1972
      %2129 = vmatpush.bf16.msra.mxu0 %v1969
      %2130 = vmatmul.bf16.gmra.mxu0 %v1823
      %v2131 = vpop.f32.mrf.mxu0
      %v2132 = vadd.f32 %v1806, %v2131
      %v2133 = vpop.f32.mrf.mxu0
      %v2134 = vadd.f32 %v1811, %v2133
      %2135 = vdwg.mxu0
      %2136 = vmatpush.bf16.msra.mxu0 %v2014
      %2137 = vmatpush.bf16.msra.mxu0 %v2011
      %2138 = vmatpush.bf16.msra.mxu0 %v2008
      %2139 = vmatpush.bf16.msra.mxu0 %v2005
      %2140 = vmatpush.bf16.msra.mxu0 %v2002
      %2141 = vmatpush.bf16.msra.mxu0 %v1999
      %2142 = vmatpush.bf16.msra.mxu0 %v1996
      %2143 = vmatpush.bf16.msra.mxu0 %v1993
      %2144 = vmatmul.bf16.gmra.mxu0 %v1824
      %v2145 = vpop.f32.mrf.mxu0
      %v2146 = vadd.f32 %v2132, %v2145
      %v2147 = vpop.f32.mrf.mxu0
      %v2148 = vadd.f32 %v2134, %v2147
      %2149 = vdwg.mxu0
      %2150 = vmatpush.bf16.msra.mxu0 0
      %2151 = vmatpush.bf16.msra.mxu0 0
      %2152 = vmatpush.bf16.msra.mxu0 0
      %2153 = vmatpush.bf16.msra.mxu0 0
      %2154 = vmatpush.bf16.msra.mxu0 0
      %2155 = vmatpush.bf16.msra.mxu0 0
      %2156 = vmatpush.bf16.msra.mxu0 %v2020
      %2157 = vmatpush.bf16.msra.mxu0 %v2017
      %2158 = vmatmul.bf16.gmra.mxu0 %v2078
      %v2159 = vpop.f32.mrf.mxu0
      %v2160 = vadd.f32 %v2146, %v2159
      %v2161 = vpop.f32.mrf.mxu0
      %v2162 = vadd.f32 %v2148, %v2161
      %2163 = vdwg.mxu0
      %2164 = vmatpush.bf16.msra.mxu0 %v1991
      %2165 = vmatpush.bf16.msra.mxu0 %v1988
      %2166 = vmatpush.bf16.msra.mxu0 %v1985
      %2167 = vmatpush.bf16.msra.mxu0 %v1982
      %2168 = vmatpush.bf16.msra.mxu0 %v1979
      %2169 = vmatpush.bf16.msra.mxu0 %v1976
      %2170 = vmatpush.bf16.msra.mxu0 %v1973
      %2171 = vmatpush.bf16.msra.mxu0 %v1970
      %2172 = vmatmul.bf16.gmra.mxu0 %v1823
      %v2173 = vpop.f32.mrf.mxu0
      %v2174 = vadd.f32 %v1806, %v2173
      %v2175 = vpop.f32.mrf.mxu0
      %v2176 = vadd.f32 %v1811, %v2175
      %2177 = vdwg.mxu0
      %2178 = vmatpush.bf16.msra.mxu0 %v2015
      %2179 = vmatpush.bf16.msra.mxu0 %v2012
      %2180 = vmatpush.bf16.msra.mxu0 %v2009
      %2181 = vmatpush.bf16.msra.mxu0 %v2006
      %2182 = vmatpush.bf16.msra.mxu0 %v2003
      %2183 = vmatpush.bf16.msra.mxu0 %v2000
      %2184 = vmatpush.bf16.msra.mxu0 %v1997
      %2185 = vmatpush.bf16.msra.mxu0 %v1994
      %2186 = vmatmul.bf16.gmra.mxu0 %v1824
      %v2187 = vpop.f32.mrf.mxu0
      %v2188 = vadd.f32 %v2174, %v2187
      %v2189 = vpop.f32.mrf.mxu0
      %v2190 = vadd.f32 %v2176, %v2189
      %2191 = vdwg.mxu0
      %2192 = vmatpush.bf16.msra.mxu0 0
      %2193 = vmatpush.bf16.msra.mxu0 0
      %2194 = vmatpush.bf16.msra.mxu0 0
      %2195 = vmatpush.bf16.msra.mxu0 0
      %2196 = vmatpush.bf16.msra.mxu0 0
      %2197 = vmatpush.bf16.msra.mxu0 0
      %2198 = vmatpush.bf16.msra.mxu0 %v2021
      %2199 = vmatpush.bf16.msra.mxu0 %v2018
      %2200 = vmatmul.bf16.gmra.mxu0 %v2078
      %v2201 = vpop.f32.mrf.mxu0
      %v2202 = vadd.f32 %v2188, %v2201
      %v2203 = vpop.f32.mrf.mxu0
      %v2204 = vadd.f32 %v2190, %v2203
      %2205 = vdwg.mxu0
      %v2206 = vmax.f32 %v2118, 0.0
      %v2207 = vmax.f32 %v2160, 0.0
      %v2208 = vmax.f32 %v2202, 0.0
      %v2209 = vmax.f32 %v2120, 0.0
      %v2210 = vmax.f32 %v2162, 0.0
      %v2211 = vmax.f32 %v2204, 0.0
      %v2212 = vmul.f32 %v2206, %v1603
      %v2213 = vmul.f32 %v2207, %v1604
      %v2214 = vmul.f32 %v2208, %v1605
      %v2215 = vmul.f32 %v2209, %v1603
      %v2216 = vmul.f32 %v2210, %v1604
      %v2217 = vmul.f32 %v2211, %v1605
      %v2218 = vpack.c.bf16 %v2213, %v2212
      %v2219 = vpack.c.bf16 %v2214, %v2214
      %v2220 = vpack.c.bf16 %v2216, %v2215
      %v2221 = vpack.c.bf16 %v2217, %v2217
      %v2226 = vunpack.c.l.b16 %v2218
      %v2227 = vunpack.c.h.b16 %v2218
      %v2228 = vunpack.c.l.b16 %v2219
      %v2229 = vunpack.c.l.b16 %v2220
      %v2230 = vunpack.c.h.b16 %v2220
      %v2231 = vunpack.c.l.b16 %v2221
      %v2232 = vpack.c.b16 %v2229, %v2226
      %v2233 = vpack.c.b16 %v2230, %v2227
      %v2234 = vpack.c.b16 %v2231, %v2228
      %2235 = vrot.lane.b32.xlu0 %v2234, 127
      %v2236 = vpop.permute.xlu0 %2235
      %2237 = vrot.lane.b32.xlu0 %v2232, 127
      %v2238 = vpop.permute.xlu0 %2237
      %2239 = vrot.lane.b32.xlu0 %v2233, 127
      %v2240 = vpop.permute.xlu0 %2239
      %v2241 = vsel %vm447, %v2236, %v2238
      %v2242 = vsel %vm447, %v2238, %v2240
      %v2243 = vsel %vm447, %v2240, %v2236
      %2244 = vrot.lane.b32.xlu0 %v2234, 126
      %v2245 = vpop.permute.xlu0 %2244
      %2246 = vrot.lane.b32.xlu0 %v2232, 126
      %v2247 = vpop.permute.xlu0 %2246
      %2248 = vrot.lane.b32.xlu0 %v2233, 126
      %v2249 = vpop.permute.xlu0 %2248
      %v2250 = vsel %vm484, %v2245, %v2247
      %v2251 = vsel %vm484, %v2247, %v2249
      %v2252 = vsel %vm484, %v2249, %v2245
      %2253 = vrot.lane.b32.xlu0 %v2234, 110
      %v2254 = vpop.permute.xlu0 %2253
      %2255 = vrot.lane.b32.xlu0 %v2232, 110
      %v2256 = vpop.permute.xlu0 %2255
      %2257 = vrot.lane.b32.xlu0 %v2233, 110
      %v2258 = vpop.permute.xlu0 %2257
      %v2259 = vsel %vm521, %v2254, %v2256
      %v2260 = vsel %vm521, %v2256, %v2258
      %v2261 = vsel %vm521, %v2258, %v2254
      %2262 = vrot.lane.b32.xlu0 %v2232, 109
      %v2263 = vpop.permute.xlu0 %2262
      %2264 = vrot.lane.b32.xlu0 %v2233, 109
      %v2265 = vpop.permute.xlu0 %2264
      %2266 = vrot.lane.b32.xlu0 %v2234, 109
      %v2267 = vpop.permute.xlu0 %2266
      %v2268 = vsel %vm558, %v2263, %v2265
      %v2269 = vsel %vm558, %v2265, %v2267
      %2270 = vrot.lane.b32.xlu0 %v2232, 108
      %v2271 = vpop.permute.xlu0 %2270
      %2272 = vrot.lane.b32.xlu0 %v2233, 108
      %v2273 = vpop.permute.xlu0 %2272
      %2274 = vrot.lane.b32.xlu0 %v2234, 108
      %v2275 = vpop.permute.xlu0 %2274
      %v2276 = vsel %vm591, %v2271, %v2273
      %v2277 = vsel %vm591, %v2273, %v2275
      %v2278 = vsel %vm591, %v2275, %v2271
      %2279 = vrot.lane.b32.xlu0 %v2232, 92
      %v2280 = vpop.permute.xlu0 %2279
      %2281 = vrot.lane.b32.xlu0 %v2233, 92
      %v2282 = vpop.permute.xlu0 %2281
      %2283 = vrot.lane.b32.xlu0 %v2234, 92
      %v2284 = vpop.permute.xlu0 %2283
      %v2285 = vsel %vm628, %v2280, %v2282
      %v2286 = vsel %vm628, %v2282, %v2284
      %v2287 = vsel %vm628, %v2284, %v2280
      %2288 = vrot.lane.b32.xlu0 %v2232, 91
      %v2289 = vpop.permute.xlu0 %2288
      %2290 = vrot.lane.b32.xlu0 %v2233, 91
      %v2291 = vpop.permute.xlu0 %2290
      %2292 = vrot.lane.b32.xlu0 %v2234, 91
      %v2293 = vpop.permute.xlu0 %2292
      %v2294 = vsel %vm665, %v2289, %v2291
      %v2295 = vsel %vm665, %v2291, %v2293
      %v2296 = vsel %vm665, %v2293, %v2289
      %2297 = vrot.lane.b32.xlu0 %v2232, 90
      %v2298 = vpop.permute.xlu0 %2297
      %2299 = vrot.lane.b32.xlu0 %v2233, 90
      %v2300 = vpop.permute.xlu0 %2299
      %2301 = vrot.lane.b32.xlu0 %v2234, 90
      %v2302 = vpop.permute.xlu0 %2301
      %v2303 = vsel %vm702, %v2298, %v2300
      %v2304 = vsel %vm702, %v2300, %v2302
      %v2305 = vsel %vm702, %v2302, %v2298
      %v2306 = vld [vmem:[%s4] sm:$0xff]
      %v2307 = vld [vmem:[%s4 + $0x8] sm:$0xff]
      %v2308 = vld [vmem:[%s4 + $0x10] sm:$0xff]
      %v2309 = vld [vmem:[%s4 + $0x18] sm:$0xff]
      %v2310 = vld [vmem:[%s7] sm:$0xff]
      %v2311 = vld [vmem:[%s7 + $0x8] sm:$0xff]
      %v2312 = vld [vmem:[%s7 + $0x10] sm:$0xff]
      %v2313 = vld [vmem:[%s7 + $0x18] sm:$0xff]
      %2315 = vset.pattern.permute.xlu0 0
      %2316 = vperm.xlu0 %2315, %v2310
      %v2317 = vpop.permute.xlu0 %2316
      %2320 = vset.pattern.permute.xlu0 0
      %2321 = vperm.xlu0 %2320, %v2311
      %v2322 = vpop.permute.xlu0 %2321
      %2325 = vset.pattern.permute.xlu0 0
      %2326 = vperm.xlu0 %2325, %v2312
      %v2327 = vpop.permute.xlu0 %2326
      %2330 = vset.pattern.permute.xlu0 0
      %2331 = vperm.xlu0 %2330, %v2313
      %v2332 = vpop.permute.xlu0 %2331
      %v2338 = vunpack.c.l.b16 %v2306
      %v2339 = vunpack.c.h.b16 %v2306
      %v2340 = vunpack.c.l.b16 %v2307
      %v2341 = vunpack.c.h.b16 %v2307
      %v2342 = vunpack.c.l.b16 %v2308
      %v2343 = vunpack.c.h.b16 %v2308
      %v2344 = vunpack.c.l.b16 %v2309
      %v2345 = vunpack.c.h.b16 %v2309
      %v2346 = vpack.c.b16 %v2340, %v2338
      %v2347 = vpack.c.b16 %v2341, %v2339
      %v2348 = vpack.c.b16 %v2344, %v2342
      %v2349 = vpack.c.b16 %v2345, %v2343
      %2352 = vrot.lane.b32.xlu0 %v2234, 19
      %v2353 = vpop.permute.xlu0 %2352
      %2354 = vrot.lane.b32.xlu0 %v2232, 19
      %v2355 = vpop.permute.xlu0 %2354
      %2356 = vrot.lane.b32.xlu0 %v2233, 19
      %v2357 = vpop.permute.xlu0 %2356
      %2358 = vrot.lane.b32.xlu0 %v2241, 19
      %v2359 = vpop.permute.xlu0 %2358
      %2360 = vrot.lane.b32.xlu0 %v2242, 19
      %v2361 = vpop.permute.xlu0 %2360
      %2362 = vrot.lane.b32.xlu0 %v2243, 19
      %v2363 = vpop.permute.xlu0 %2362
      %2364 = vrot.lane.b32.xlu0 %v2236, 19
      %v2365 = vpop.permute.xlu0 %2364
      %2366 = vrot.lane.b32.xlu0 %v2250, 19
      %v2367 = vpop.permute.xlu0 %2366
      %2368 = vrot.lane.b32.xlu0 %v2251, 19
      %v2369 = vpop.permute.xlu0 %2368
      %2370 = vrot.lane.b32.xlu0 %v2252, 19
      %v2371 = vpop.permute.xlu0 %2370
      %2372 = vrot.lane.b32.xlu0 %v2245, 19
      %v2373 = vpop.permute.xlu0 %2372
      %2374 = vrot.lane.b32.xlu0 %v2259, 19
      %v2375 = vpop.permute.xlu0 %2374
      %2376 = vrot.lane.b32.xlu0 %v2260, 19
      %v2377 = vpop.permute.xlu0 %2376
      %2378 = vrot.lane.b32.xlu0 %v2261, 19
      %v2379 = vpop.permute.xlu0 %2378
      %2380 = vrot.lane.b32.xlu0 %v2254, 19
      %v2381 = vpop.permute.xlu0 %2380
      %2382 = vrot.lane.b32.xlu0 %v2263, 19
      %v2383 = vpop.permute.xlu0 %2382
      %2384 = vrot.lane.b32.xlu0 %v2268, 19
      %v2385 = vpop.permute.xlu0 %2384
      %2386 = vrot.lane.b32.xlu0 %v2269, 19
      %v2387 = vpop.permute.xlu0 %2386
      %2388 = vrot.lane.b32.xlu0 %v2267, 19
      %v2389 = vpop.permute.xlu0 %2388
      %2390 = vrot.lane.b32.xlu0 %v2271, 19
      %v2391 = vpop.permute.xlu0 %2390
      %2392 = vrot.lane.b32.xlu0 %v2276, 19
      %v2393 = vpop.permute.xlu0 %2392
      %2394 = vrot.lane.b32.xlu0 %v2277, 19
      %v2395 = vpop.permute.xlu0 %2394
      %2396 = vrot.lane.b32.xlu0 %v2278, 19
      %v2397 = vpop.permute.xlu0 %2396
      %2398 = vrot.lane.b32.xlu0 %v2280, 19
      %v2399 = vpop.permute.xlu0 %2398
      %2400 = vrot.lane.b32.xlu0 %v2285, 19
      %v2401 = vpop.permute.xlu0 %2400
      %2402 = vrot.lane.b32.xlu0 %v2286, 19
      %v2403 = vpop.permute.xlu0 %2402
      %2404 = vrot.lane.b32.xlu0 %v2287, 19
      %v2405 = vpop.permute.xlu0 %2404
      %2406 = vrot.lane.b32.xlu0 %v2289, 19
      %v2407 = vpop.permute.xlu0 %2406
      %2408 = vrot.lane.b32.xlu0 %v2294, 19
      %v2409 = vpop.permute.xlu0 %2408
      %2410 = vrot.lane.b32.xlu0 %v2295, 19
      %v2411 = vpop.permute.xlu0 %2410
      %2412 = vrot.lane.b32.xlu0 %v2296, 19
      %v2413 = vpop.permute.xlu0 %2412
      %2414 = vrot.lane.b32.xlu0 %v2298, 19
      %v2415 = vpop.permute.xlu0 %2414
      %2416 = vrot.lane.b32.xlu0 %v2303, 19
      %v2417 = vpop.permute.xlu0 %2416
      %2418 = vrot.lane.b32.xlu0 %v2304, 19
      %v2419 = vpop.permute.xlu0 %2418
      %2420 = vrot.lane.b32.xlu0 %v2305, 19
      %v2421 = vpop.permute.xlu0 %2420
      %v2422 = vsel %vm1081, %v2353, %v2355
      %v2423 = vsel %vm1081, %v2355, %v2357
      %v2424 = vsel %vm1081, %v2357, %v2353
      %v2425 = vsel %vm1081, %v2359, %v2361
      %v2426 = vsel %vm1081, %v2361, %v2363
      %v2427 = vsel %vm1081, %v2363, %v2365
      %v2428 = vsel %vm1081, %v2367, %v2369
      %v2429 = vsel %vm1081, %v2369, %v2371
      %v2430 = vsel %vm1081, %v2371, %v2373
      %v2431 = vsel %vm1081, %v2375, %v2377
      %v2432 = vsel %vm1081, %v2377, %v2379
      %v2433 = vsel %vm1081, %v2379, %v2381
      %v2434 = vsel %vm1081, %v2383, %v2385
      %v2435 = vsel %vm1081, %v2385, %v2387
      %v2436 = vsel %vm1081, %v2387, %v2389
      %v2437 = vsel %vm1081, %v2391, %v2393
      %v2438 = vsel %vm1081, %v2393, %v2395
      %v2439 = vsel %vm1081, %v2395, %v2397
      %v2440 = vsel %vm1081, %v2399, %v2401
      %v2441 = vsel %vm1081, %v2401, %v2403
      %v2442 = vsel %vm1081, %v2403, %v2405
      %v2443 = vsel %vm1081, %v2407, %v2409
      %v2444 = vsel %vm1081, %v2409, %v2411
      %v2445 = vsel %vm1081, %v2411, %v2413
      %v2446 = vsel %vm1081, %v2415, %v2417
      %v2447 = vsel %vm1081, %v2417, %v2419
      %v2448 = vsel %vm1081, %v2419, %v2421
      %vm2476 = vcmask 130048
      %v2478 = vsel %vm2476, %v2347, 0
      %v2481 = vsel %vm2476, %v2349, 0
      %2483 = vmatpush.bf16.msra.mxu0 %v2443
      %2484 = vmatpush.bf16.msra.mxu0 %v2440
      %2485 = vmatpush.bf16.msra.mxu0 %v2437
      %2486 = vmatpush.bf16.msra.mxu0 %v2434
      %2487 = vmatpush.bf16.msra.mxu0 %v2431
      %2488 = vmatpush.bf16.msra.mxu0 %v2428
      %2489 = vmatpush.bf16.msra.mxu0 %v2425
      %2490 = vmatpush.bf16.msra.mxu0 %v2422
      %2491 = vmatmul.bf16.gmra.mxu0 %v2346
      %v2492 = vpop.f32.mrf.mxu0
      %v2493 = vadd.f32 %v2317, %v2492
      %v2494 = vpop.f32.mrf.mxu0
      %v2495 = vadd.f32 %v2322, %v2494
      %2496 = vmatmul.bf16.gmra.mxu0 %v2348
      %v2497 = vpop.f32.mrf.mxu0
      %v2498 = vadd.f32 %v2327, %v2497
      %v2499 = vpop.f32.mrf.mxu0
      %v2500 = vadd.f32 %v2332, %v2499
      %2501 = vdwg.mxu0
      %2502 = vmatpush.bf16.msra.mxu0 0
      %2503 = vmatpush.bf16.msra.mxu0 0
      %2504 = vmatpush.bf16.msra.mxu0 0
      %2505 = vmatpush.bf16.msra.mxu0 0
      %2506 = vmatpush.bf16.msra.mxu0 0
      %2507 = vmatpush.bf16.msra.mxu0 0
      %2508 = vmatpush.bf16.msra.mxu0 0
      %2509 = vmatpush.bf16.msra.mxu0 %v2446
      %2510 = vmatmul.bf16.gmra.mxu0 %v2478
      %v2511 = vpop.f32.mrf.mxu0
      %v2512 = vadd.f32 %v2493, %v2511
      %v2513 = vpop.f32.mrf.mxu0
      %v2514 = vadd.f32 %v2495, %v2513
      %2515 = vmatmul.bf16.gmra.mxu0 %v2481
      %v2516 = vpop.f32.mrf.mxu0
      %v2517 = vadd.f32 %v2498, %v2516
      %v2518 = vpop.f32.mrf.mxu0
      %v2519 = vadd.f32 %v2500, %v2518
      %2520 = vdwg.mxu0
      %2521 = vmatpush.bf16.msra.mxu0 %v2444
      %2522 = vmatpush.bf16.msra.mxu0 %v2441
      %2523 = vmatpush.bf16.msra.mxu0 %v2438
      %2524 = vmatpush.bf16.msra.mxu0 %v2435
      %2525 = vmatpush.bf16.msra.mxu0 %v2432
      %2526 = vmatpush.bf16.msra.mxu0 %v2429
      %2527 = vmatpush.bf16.msra.mxu0 %v2426
      %2528 = vmatpush.bf16.msra.mxu0 %v2423
      %2529 = vmatmul.bf16.gmra.mxu0 %v2346
      %v2530 = vpop.f32.mrf.mxu0
      %v2531 = vadd.f32 %v2317, %v2530
      %v2532 = vpop.f32.mrf.mxu0
      %v2533 = vadd.f32 %v2322, %v2532
      %2534 = vmatmul.bf16.gmra.mxu0 %v2348
      %v2535 = vpop.f32.mrf.mxu0
      %v2536 = vadd.f32 %v2327, %v2535
      %v2537 = vpop.f32.mrf.mxu0
      %v2538 = vadd.f32 %v2332, %v2537
      %2539 = vdwg.mxu0
      %2540 = vmatpush.bf16.msra.mxu0 0
      %2541 = vmatpush.bf16.msra.mxu0 0
      %2542 = vmatpush.bf16.msra.mxu0 0
      %2543 = vmatpush.bf16.msra.mxu0 0
      %2544 = vmatpush.bf16.msra.mxu0 0
      %2545 = vmatpush.bf16.msra.mxu0 0
      %2546 = vmatpush.bf16.msra.mxu0 0
      %2547 = vmatpush.bf16.msra.mxu0 %v2447
      %2548 = vmatmul.bf16.gmra.mxu0 %v2478
      %v2549 = vpop.f32.mrf.mxu0
      %v2550 = vadd.f32 %v2531, %v2549
      %v2551 = vpop.f32.mrf.mxu0
      %v2552 = vadd.f32 %v2533, %v2551
      %2553 = vmatmul.bf16.gmra.mxu0 %v2481
      %v2554 = vpop.f32.mrf.mxu0
      %v2555 = vadd.f32 %v2536, %v2554
      %v2556 = vpop.f32.mrf.mxu0
      %v2557 = vadd.f32 %v2538, %v2556
      %2558 = vdwg.mxu0
      %2559 = vmatpush.bf16.msra.mxu0 %v2445
      %2560 = vmatpush.bf16.msra.mxu0 %v2442
      %2561 = vmatpush.bf16.msra.mxu0 %v2439
      %2562 = vmatpush.bf16.msra.mxu0 %v2436
      %2563 = vmatpush.bf16.msra.mxu0 %v2433
      %2564 = vmatpush.bf16.msra.mxu0 %v2430
      %2565 = vmatpush.bf16.msra.mxu0 %v2427
      %2566 = vmatpush.bf16.msra.mxu0 %v2424
      %2567 = vmatmul.bf16.gmra.mxu0 %v2346
      %v2568 = vpop.f32.mrf.mxu0
      %v2569 = vadd.f32 %v2317, %v2568
      %v2570 = vpop.f32.mrf.mxu0
      %v2571 = vadd.f32 %v2322, %v2570
      %2572 = vmatmul.bf16.gmra.mxu0 %v2348
      %v2573 = vpop.f32.mrf.mxu0
      %v2574 = vadd.f32 %v2327, %v2573
      %v2575 = vpop.f32.mrf.mxu0
      %v2576 = vadd.f32 %v2332, %v2575
      %2577 = vdwg.mxu0
      %2578 = vmatpush.bf16.msra.mxu0 0
      %2579 = vmatpush.bf16.msra.mxu0 0
      %2580 = vmatpush.bf16.msra.mxu0 0
      %2581 = vmatpush.bf16.msra.mxu0 0
      %2582 = vmatpush.bf16.msra.mxu0 0
      %2583 = vmatpush.bf16.msra.mxu0 0
      %2584 = vmatpush.bf16.msra.mxu0 0
      %2585 = vmatpush.bf16.msra.mxu0 %v2448
      %2586 = vmatmul.bf16.gmra.mxu0 %v2478
      %v2587 = vpop.f32.mrf.mxu0
      %v2588 = vadd.f32 %v2569, %v2587
      %v2589 = vpop.f32.mrf.mxu0
      %v2590 = vadd.f32 %v2571, %v2589
      %2591 = vmatmul.bf16.gmra.mxu0 %v2481
      %v2592 = vpop.f32.mrf.mxu0
      %v2593 = vadd.f32 %v2574, %v2592
      %v2594 = vpop.f32.mrf.mxu0
      %v2595 = vadd.f32 %v2576, %v2594
      %2596 = vdwg.mxu0
      %v2597 = vmax.f32 %v2512, 0.0
      %v2598 = vmax.f32 %v2550, 0.0
      %v2599 = vmax.f32 %v2588, 0.0
      %v2600 = vmax.f32 %v2514, 0.0
      %v2601 = vmax.f32 %v2552, 0.0
      %v2602 = vmax.f32 %v2590, 0.0
      %v2603 = vmax.f32 %v2517, 0.0
      %v2604 = vmax.f32 %v2555, 0.0
      %v2605 = vmax.f32 %v2593, 0.0
      %v2606 = vmax.f32 %v2519, 0.0
      %v2607 = vmax.f32 %v2557, 0.0
      %v2608 = vmax.f32 %v2595, 0.0
      %v2609 = vmul.f32 %v2597, %v1603
      %v2610 = vmul.f32 %v2598, %v1604
      %v2611 = vmul.f32 %v2599, %v1605
      %v2612 = vmul.f32 %v2600, %v1603
      %v2613 = vmul.f32 %v2601, %v1604
      %v2614 = vmul.f32 %v2602, %v1605
      %v2615 = vmul.f32 %v2603, %v1603
      %v2616 = vmul.f32 %v2604, %v1604
      %v2617 = vmul.f32 %v2605, %v1605
      %v2618 = vmul.f32 %v2606, %v1603
      %v2619 = vmul.f32 %v2607, %v1604
      %v2620 = vmul.f32 %v2608, %v1605
      %2621 = vst [vmem:[%s352] sm:$0xff] %v2609
      %2622 = vst [vmem:[%s352 + $0x8] sm:$0xff] %v2610
      %2623 = vst [vmem:[%s352 + $0x10] sm:$0xff] %v2611
      %2624 = vst [vmem:[%s352 + $0x18] sm:$0xff] %v2612
      %2625 = vst [vmem:[%s352 + $0x20] sm:$0xff] %v2613
      %2626 = vst [vmem:[%s352 + $0x28] sm:$0xff] %v2614
      %2627 = vst [vmem:[%s352 + $0x30] sm:$0xff] %v2615
      %2628 = vst [vmem:[%s352 + $0x38] sm:$0xff] %v2616
      %2629 = vst [vmem:[%s352 + $0x40] sm:$0xff] %v2617
      %2630 = vst [vmem:[%s352 + $0x48] sm:$0xff] %v2618
      %2631 = vst [vmem:[%s352 + $0x50] sm:$0xff] %v2619
      %2632 = vst [vmem:[%s352 + $0x58] sm:$0xff] %v2620
      %p2633 = scmp.lt.s32.totalorder %s20, 1
      %s2634 = scalar_select %p2633, %s20, 1
      %s2635 = smul.addr %s2634, 12
      %s2636 = smul.addr %s2635, 8
      %s2637 = scalar_lea.vmem %s9, %s2636
      // Predicated region
      $region57: #{a_call__.1} parent=55 // pred_check
        %p2638 = pneg %p237
      $region58: #{a_call__.1} parent=55 // pred_check_branch
        %2640 = sbr.rel (%p2638) target = $region60
      $region59: #{a_call__.1} parent=55 // pred_region
        _
      $region60: #{a_call__.1} parent=55 // pred_fallthru
        _
    $region56: #{a_call__.1} parent=5 // pred_fallthru
      _
    %p2641 = scmp.le.s32.totalorder 2, %s15
    // Predicated region
    $region61: #{a_call__.1} parent=5 // pred_check
      %p2642 = pneg %p2641
    $region62: #{a_call__.1} parent=5 // pred_check_branch
      %2644 = sbr.rel (%p2642) target = $region64
    $region63: #{a_call__.1} parent=5 // pred_region
      %s2645 = ssub.s32 %s15, 2
      // Predicated region
      $region65: #{a_call__.1} parent=63 // pred_check
        %p2646 = pneg %p243
      $region66: #{a_call__.1} parent=63 // pred_check_branch
        %2648 = sbr.rel (%p2646) target = $region68
      $region67: #{a_call__.1} parent=63 // pred_region
        %p2649 = scmp.lt.s32.totalorder %s21, 1
        %s2650 = scalar_select %p2649, %s21, 1
        %s2651 = smul.addr %s2650, 12
        %s2652 = smul.addr %s2651, 8
        %s2653 = scalar_lea.vmem %s9, %s2652
      $region68: #{a_call__.1} parent=63 // pred_fallthru
        _
    $region64: #{a_call__.1} parent=5 // pred_fallthru
      _
  $region6: #{a_call__.1} parent=0 // loop_footer
    %s19 = sadd.s32 1, %s15
  $region7: #{a_call__.1} parent=0 // loop_footer_branch
    %14 = sbr.rel target = $region3
  $region8: #{a_call__.1} parent=0 // loop_exit
    _

</llo_original>
